<compile_context>
chip_gen: v7x
topology: tpu7x:2x2x1
jax: 0.10.0
libtpu: 0.0.40
codegen_flags: <defaults>
</compile_context>

<pallas_src>
import jax
import jax.numpy as jnp
from jax import lax
from jax.experimental import pallas as pl
from jax.experimental.pallas import tpu as pltpu


def _round_up(x, m):
    return ((x + m - 1) // m) * m


def _lstm_softmax_kernel(x_ref, wih_ref, whh_ref, b_ref, wl_ref, bl_ref,
                         out_ref, h_scr, c_scr, xg_scr, hall_scr):
    """One grid step = one batch block (axis 0, parallel) x one chunk of T
    timesteps (axis 1, sequential/arbitrary)."""
    TB, _ = x_ref.shape
    B, H = h_scr.shape
    L = out_ref.shape[-1]
    T = TB // B

    # Zero initial hidden / cell state at the start of every batch block's
    # sequence (matches clear_hidden_cell()).
    @pl.when(pl.program_id(1) == 0)
    def _():
        h_scr[...] = jnp.zeros_like(h_scr)
        c_scr[...] = jnp.zeros_like(c_scr)

    # Batched input projection for the whole chunk, staged into VMEM scratch
    # (off the serial critical path; keeps per-step vreg live ranges small).
    xg_scr[...] = (jnp.dot(x_ref[...], wih_ref[...],
                           preferred_element_type=jnp.float32)
                   + b_ref[...])

    whh = whh_ref[...]          # hoisted, loop-invariant weight load
    cdt = whh.dtype             # MXU operand dtype (f32 or bf16)

    # Serial recurrence: only h @ Whh^T per step (PyTorch gate order i,f,g,o).
    def step(t, carry):
        h, c = carry
        off = pl.multiple_of(t * B, B)        # B is a multiple of 8 -> aligned
        gates = (xg_scr[pl.ds(off, B), :]
                 + jnp.dot(h.astype(cdt), whh,
                           preferred_element_type=jnp.float32))
        # NOTE: sub-lane slices when H % 128 != 0; free tile views otherwise.
        i_g = jax.nn.sigmoid(gates[:, 0 * H:1 * H])
        f_g = jax.nn.sigmoid(gates[:, 1 * H:2 * H])
        g_g = jnp.tanh(gates[:, 2 * H:3 * H])
        o_g = jax.nn.sigmoid(gates[:, 3 * H:4 * H])
        c = f_g * c + i_g * g_g
        h = o_g * jnp.tanh(c)
        hall_scr[pl.ds(off, B), :] = h
        return h, c

    h, c = lax.fori_loop(0, T, step, (h_scr[...], c_scr[...]),
                         unroll=min(T, 8))
    h_scr[...] = h
    c_scr[...] = c

    # Batched classifier + softmax over labels, once per chunk.
    logits = (jnp.dot(hall_scr[...].astype(wl_ref.dtype), wl_ref[...],
                      preferred_element_type=jnp.float32)
              + bl_ref[...])
    m = jnp.max(logits, axis=-1, keepdims=True)
    e = jnp.exp(logits - m)
    s = jnp.sum(e, axis=-1, keepdims=True)
    out_ref[...] = (e * pl.reciprocal(s, approx=True)).astype(out_ref.dtype)


def lstm_classifier_combined_outputs(x, weight_ih, weight_hh, bias_ih, bias_hh,
                                     lin_w, lin_b, *, max_chunk=32,
                                     batch_blocks=1,
                                     compute_dtype=jnp.float32):
    """x: (S, B, F) f32.  Returns (S, B, L) softmax probabilities (f32).

    batch_blocks > 1 adds a leading 'parallel' grid axis over independent batch
    blocks (useful on v7x megacore).  compute_dtype=bfloat16 feeds bf16 to the
    MXU operands while keeping f32 accumulation / elementwise math.
    """
    S, B, F = x.shape
    H = weight_ih.shape[0] // 4
    L = lin_w.shape[0]

    assert B % batch_blocks == 0, "batch_blocks must divide batch"
    nb = batch_blocks
    B_blk = B // nb
    Bp = _round_up(B_blk, 8)                 # sublane-aligned rows per block
    T = max(1, min(S, max_chunk))            # timesteps per grid step
    S_pad = _round_up(S, T)                  # pad instead of degrading to T=1
    n_chunks = S_pad // T

    # Host-side layout: pad time, split/pad batch blocks, flatten (time, batch)
    # so the kernel reads a 2-D (T*Bp, F) slab per grid step (no in-kernel
    # reshape of the input tile).
    x_p = x
    if S_pad != S:
        x_p = jnp.pad(x_p, ((0, S_pad - S), (0, 0), (0, 0)))
    x_p = x_p.reshape(S_pad, nb, B_blk, F)
    if Bp != B_blk:
        x_p = jnp.pad(x_p, ((0, 0), (0, 0), (0, Bp - B_blk), (0, 0)))
    x_p = x_p.transpose(1, 0, 2, 3).reshape(nb, S_pad * Bp, F)
    x_p = x_p.astype(compute_dtype)

    # Pre-transposed weights (row-major matmuls in the kernel); MXU operands in
    # compute_dtype, biases / accumulation in f32.
    wih_t = weight_ih.T.astype(compute_dtype)                 # (F, 4H)
    whh_t = weight_hh.T.astype(compute_dtype)                 # (H, 4H)
    b = (bias_ih + bias_hh).reshape(1, 4 * H).astype(jnp.float32)
    wl_t = lin_w.T.astype(compute_dtype)                      # (H, L)
    bl = lin_b.reshape(1, L).astype(jnp.float32)              # (1, L)

    # Explicit VMEM budget (v5e scoped default is only 16 MiB); capped so it is
    # valid on v7x's 64 MiB physical VMEM as well.
    csize = jnp.dtype(compute_dtype).itemsize
    vmem_needed = (2 * T * Bp * F * csize                          # x (dbl buf)
                   + 2 * (F * 4 * H + H * 4 * H + H * L) * csize   # weights
                   + 2 * (4 * H + L) * 4                           # biases
                   + 2 * T * Bp * L * 4                            # out
                   + (2 * Bp * H + T * Bp * 4 * H + T * Bp * H) * 4)  # scratch
    vmem_limit = int(min(48 << 20, max(32 << 20, 2 * vmem_needed)))

    cost = pl.CostEstimate(
        flops=int(2 * nb * S_pad * Bp * (F * 4 * H + H * 4 * H + H * L)),
        transcendentals=int(nb * S_pad * Bp * (5 * H + L)),
        bytes_accessed=int(nb * S_pad * Bp * F * csize
                           + (wih_t.size + whh_t.size + wl_t.size) * csize
                           + (b.size + bl.size) * 4
                           + nb * S_pad * Bp * L * 4),
    )

    grid_spec = pltpu.PrefetchScalarGridSpec(
        num_scalar_prefetch=0,
        grid=(nb, n_chunks),
        in_specs=[
            pl.BlockSpec((None, T * Bp, F), lambda bi, ci: (bi, ci, 0)),
            pl.BlockSpec((F, 4 * H), lambda bi, ci: (0, 0)),
            pl.BlockSpec((H, 4 * H), lambda bi, ci: (0, 0)),
            pl.BlockSpec((1, 4 * H), lambda bi, ci: (0, 0)),
            pl.BlockSpec((H, L), lambda bi, ci: (0, 0)),
            pl.BlockSpec((1, L), lambda bi, ci: (0, 0)),
        ],
        out_specs=pl.BlockSpec((None, T * Bp, L), lambda bi, ci: (bi, ci, 0)),
        scratch_shapes=[
            pltpu.VMEM((Bp, H), jnp.float32),           # h state (persists)
            pltpu.VMEM((Bp, H), jnp.float32),           # c state (persists)
            pltpu.VMEM((T * Bp, 4 * H), jnp.float32),   # staged x-projection
            pltpu.VMEM((T * Bp, H), jnp.float32),       # per-chunk hidden states
        ],
    )

    out = pl.pallas_call(
        _lstm_softmax_kernel,
        out_shape=jax.ShapeDtypeStruct((nb, S_pad * Bp, L), jnp.float32),
        grid_spec=grid_spec,
        compiler_params=pltpu.CompilerParams(
            # batch-block axis independent (megacore on v7x); time/chunk axis
            # carries the recurrence -> must stay sequential.
            dimension_semantics=("parallel", "arbitrary"),
            vmem_limit_bytes=vmem_limit),
        cost_estimate=cost,
    )(x_p, wih_t, whh_t, b, wl_t, bl)

    # Reassemble (S, B, L): drop time / batch padding.
    out = out.reshape(nb, S_pad, Bp, L).transpose(1, 0, 2, 3)
    out = out[:S, :, :B_blk, :].reshape(S, B, L)
    return out


def _reference(x, weight_ih, weight_hh, bias_ih, bias_hh, lin_w, lin_b):
    """Pure-JAX reference mirroring torch.nn.LSTM + Linear + softmax(dim=2)."""
    S, B, F = x.shape
    H = weight_hh.shape[1]

    def step(carry, x_t):
        h, c = carry
        gates = x_t @ weight_ih.T + bias_ih + h @ weight_hh.T + bias_hh
        i = jax.nn.sigmoid(gates[:, 0 * H:1 * H])
        f = jax.nn.sigmoid(gates[:, 1 * H:2 * H])
        g = jnp.tanh(gates[:, 2 * H:3 * H])
        o = jax.nn.sigmoid(gates[:, 3 * H:4 * H])
        c = f * c + i * g
        h = o * jnp.tanh(c)
        return (h, c), h

    h0 = jnp.zeros((B, H), jnp.float32)
    c0 = jnp.zeros((B, H), jnp.float32)
    _, hs = jax.lax.scan(step, (h0, c0), x)
    logits = hs @ lin_w.T + lin_b
    return jax.nn.softmax(logits, axis=2)


if __name__ == "__main__":
    # Small shapes consistent with the module.  clear_hidden_cell() implies
    # batch == seq_len (hidden shape (1, seq_len, hidden)), so use B = S.
    S = 8            # seq_len
    B = 8            # batch (== seq_len, see above)
    F = 16           # num_features
    H = 32           # hidden_layer_size
    L = 4            # num_labels

    key = jax.random.PRNGKey(0)
    ks = jax.random.split(key, 7)
    scale = 1.0 / jnp.sqrt(H)
    x = jax.random.normal(ks[0], (S, B, F), jnp.float32)
    weight_ih = scale * jax.random.normal(ks[1], (4 * H, F), jnp.float32)
    weight_hh = scale * jax.random.normal(ks[2], (4 * H, H), jnp.float32)
    bias_ih = scale * jax.random.normal(ks[3], (4 * H,), jnp.float32)
    bias_hh = scale * jax.random.normal(ks[4], (4 * H,), jnp.float32)
    lin_w = scale * jax.random.normal(ks[5], (L, H), jnp.float32)
    lin_b = scale * jax.random.normal(ks[6], (L,), jnp.float32)

    ref = _reference(x, weight_ih, weight_hh, bias_ih, bias_hh, lin_w, lin_b)

    # Single batch block (v5e/v6e default path).
    out1 = lstm_classifier_combined_outputs(
        x, weight_ih, weight_hh, bias_ih, bias_hh, lin_w, lin_b,
        batch_blocks=1)
    out1 = jax.block_until_ready(out1)
    assert out1.shape == (S, B, L)
    # Tolerance loosened because the kernel softmax uses the EUP approximate
    # reciprocal (pl.reciprocal(..., approx=True)).
    assert jnp.allclose(out1, ref, atol=2e-3, rtol=2e-3), "mismatch (1 block)"

    # Two batch blocks (v7x megacore path; sequential but correct elsewhere).
    out2 = lstm_classifier_combined_outputs(
        x, weight_ih, weight_hh, bias_ih, bias_hh, lin_w, lin_b,
        batch_blocks=2)
    out2 = jax.block_until_ready(out2)
    assert out2.shape == (S, B, L)
    assert jnp.allclose(out2, ref, atol=2e-3, rtol=2e-3), "mismatch (2 blocks)"

    print("KERNEL_OK")
</pallas_src>

<mosaic_0001>
module attributes {stable_mosaic.version = 11 : i64} {
  func.func @_lstm_softmax_kernel(%arg0: i32, %arg1: i32, %arg2: memref<1x64x16xf32, #tpu.memory_space<vmem>>, %arg3: memref<16x128xf32, #tpu.memory_space<vmem>>, %arg4: memref<32x128xf32, #tpu.memory_space<vmem>>, %arg5: memref<1x128xf32, #tpu.memory_space<vmem>>, %arg6: memref<32x4xf32, #tpu.memory_space<vmem>>, %arg7: memref<1x4xf32, #tpu.memory_space<vmem>>, %arg8: memref<1x64x4xf32, #tpu.memory_space<vmem>>, %arg9: memref<8x32xf32, #tpu.memory_space<vmem>>, %arg10: memref<8x32xf32, #tpu.memory_space<vmem>>, %arg11: memref<64x128xf32, #tpu.memory_space<vmem>>, %arg12: memref<64x32xf32, #tpu.memory_space<vmem>>) attributes {dimension_semantics = [#tpu.dimension_semantics<parallel>, #tpu.dimension_semantics<arbitrary>], iteration_bounds = array<i64: 1, 1>, scalar_prefetch = 0 : i64, scratch_operands = 4 : i64, tpu.core_type = #tpu.core_type<tc>, window_params = [{transform_indices = @transform_0, window_bounds = array<i64: 1, 64, 16>}, {pipeline_mode = #tpu.pipeline_mode<synchronous>, transform_indices = @transform_1, window_bounds = array<i64: 16, 128>}, {pipeline_mode = #tpu.pipeline_mode<synchronous>, transform_indices = @transform_2, window_bounds = array<i64: 32, 128>}, {pipeline_mode = #tpu.pipeline_mode<synchronous>, transform_indices = @transform_3, window_bounds = array<i64: 1, 128>}, {pipeline_mode = #tpu.pipeline_mode<synchronous>, transform_indices = @transform_4, window_bounds = array<i64: 32, 4>}, {pipeline_mode = #tpu.pipeline_mode<synchronous>, transform_indices = @transform_5, window_bounds = array<i64: 1, 4>}, {transform_indices = @transform_6, window_bounds = array<i64: 1, 64, 4>}]} {
    %c0_i32 = arith.constant 0 : i32
    %0 = arith.cmpi eq, %arg1, %c0_i32 : i32
    %1 = arith.extui %0 : i1 to i32
    %c0_i32_0 = arith.constant 0 : i32
    %2 = arith.cmpi ne, %1, %c0_i32_0 : i32
    scf.if %2 {
      %cst_88 = arith.constant 0.000000e+00 : f32
      %299 = vector.broadcast %cst_88 : f32 to vector<8x32xf32>
      %c0_89 = arith.constant 0 : index
      %c0_90 = arith.constant 0 : index
      %300 = vector.load %arg9[%c0_89, %c0_90] : memref<8x32xf32, #tpu.memory_space<vmem>>, vector<8x32xf32>
      tpu.vector_store %arg9[%c0_89, %c0_90], %299 {strides = array<i32>} : memref<8x32xf32, #tpu.memory_space<vmem>>, vector<8x32xf32>,
      %cst_91 = arith.constant 0.000000e+00 : f32
      %301 = vector.broadcast %cst_91 : f32 to vector<8x32xf32>
      %c0_92 = arith.constant 0 : index
      %c0_93 = arith.constant 0 : index
      %302 = vector.load %arg10[%c0_92, %c0_93] : memref<8x32xf32, #tpu.memory_space<vmem>>, vector<8x32xf32>
      tpu.vector_store %arg10[%c0_92, %c0_93], %301 {strides = array<i32>} : memref<8x32xf32, #tpu.memory_space<vmem>>, vector<8x32xf32>,
    } else {
    }
    %c0 = arith.constant 0 : index
    %c0_1 = arith.constant 0 : index
    %c0_2 = arith.constant 0 : index
    %3 = vector.load %arg2[%c0, %c0_1, %c0_2] : memref<1x64x16xf32, #tpu.memory_space<vmem>>, vector<1x64x16xf32>
    %4 = vector.shape_cast %3 : vector<1x64x16xf32> to vector<64x16xf32>
    %c0_3 = arith.constant 0 : index
    %c0_4 = arith.constant 0 : index
    %5 = vector.load %arg3[%c0_3, %c0_4] : memref<16x128xf32, #tpu.memory_space<vmem>>, vector<16x128xf32>
    %cst = arith.constant dense<0.000000e+00> : vector<64x128xf32>
    %6 = tpu.matmul %4, %5, %cst {dimension_numbers = #tpu.dot_dimension_numbers<[1], [0], [0], [1], [0, 0, 1, 1], [], []>} : vector<64x16xf32>, vector<16x128xf32>, vector<64x128xf32> -> vector<64x128xf32>
    %c0_5 = arith.constant 0 : index
    %c0_6 = arith.constant 0 : index
    %7 = vector.load %arg5[%c0_5, %c0_6] : memref<1x128xf32, #tpu.memory_space<vmem>>, vector<1x128xf32>
    %8 = vector.broadcast %7 : vector<1x128xf32> to vector<64x128xf32>
    %9 = arith.addf %6, %8 : vector<64x128xf32>
    %c0_7 = arith.constant 0 : index
    %c0_8 = arith.constant 0 : index
    %10 = vector.load %arg11[%c0_7, %c0_8] : memref<64x128xf32, #tpu.memory_space<vmem>>, vector<64x128xf32>
    tpu.vector_store %arg11[%c0_7, %c0_8], %9 {strides = array<i32>} : memref<64x128xf32, #tpu.memory_space<vmem>>, vector<64x128xf32>,
    %c0_9 = arith.constant 0 : index
    %c0_10 = arith.constant 0 : index
    %11 = vector.load %arg4[%c0_9, %c0_10] : memref<32x128xf32, #tpu.memory_space<vmem>>, vector<32x128xf32>
    %c0_11 = arith.constant 0 : index
    %c0_12 = arith.constant 0 : index
    %12 = vector.load %arg9[%c0_11, %c0_12] : memref<8x32xf32, #tpu.memory_space<vmem>>, vector<8x32xf32>
    %c0_13 = arith.constant 0 : index
    %c0_14 = arith.constant 0 : index
    %13 = vector.load %arg10[%c0_13, %c0_14] : memref<8x32xf32, #tpu.memory_space<vmem>>, vector<8x32xf32>
    %c0_i32_15 = arith.constant 0 : i32
    %c8_i32 = arith.constant 8 : i32
    %14 = arith.muli %c0_i32_15, %c8_i32 : i32
    %15 = tpu.assume_multiple %14, 8 : i32
    %16 = arith.index_cast %15 : i32 to index
    %c0_16 = arith.constant 0 : index
    %17 = vector.load %arg11[%16, %c0_16] : memref<64x128xf32, #tpu.memory_space<vmem>>, vector<8x128xf32>
    %cst_17 = arith.constant dense<0.000000e+00> : vector<8x128xf32>
    %18 = tpu.matmul %12, %11, %cst_17 {dimension_numbers = #tpu.dot_dimension_numbers<[1], [0], [0], [1], [0, 0, 1, 1], [], []>} : vector<8x32xf32>, vector<32x128xf32>, vector<8x128xf32> -> vector<8x128xf32>
    %19 = arith.addf %17, %18 : vector<8x128xf32>
    %20 = vector.extract_strided_slice %19 {offsets = [0, 0], sizes = [8, 32], strides = [1, 1]} : vector<8x128xf32> to vector<8x32xf32>
    %21 = arith.negf %20 : vector<8x32xf32>
    %22 = math.exp %21 : vector<8x32xf32>
    %cst_18 = arith.constant 1.000000e+00 : f32
    %23 = vector.broadcast %cst_18 : f32 to vector<8x32xf32>
    %24 = arith.addf %23, %22 : vector<8x32xf32>
    %25 = arith.divf %23, %24 : vector<8x32xf32>
    %26 = vector.extract_strided_slice %19 {offsets = [0, 32], sizes = [8, 32], strides = [1, 1]} : vector<8x128xf32> to vector<8x32xf32>
    %27 = arith.negf %26 : vector<8x32xf32>
    %28 = math.exp %27 : vector<8x32xf32>
    %cst_19 = arith.constant 1.000000e+00 : f32
    %29 = vector.broadcast %cst_19 : f32 to vector<8x32xf32>
    %30 = arith.addf %29, %28 : vector<8x32xf32>
    %31 = arith.divf %29, %30 : vector<8x32xf32>
    %32 = vector.extract_strided_slice %19 {offsets = [0, 64], sizes = [8, 32], strides = [1, 1]} : vector<8x128xf32> to vector<8x32xf32>
    %33 = math.tanh %32 : vector<8x32xf32>
    %34 = vector.extract_strided_slice %19 {offsets = [0, 96], sizes = [8, 32], strides = [1, 1]} : vector<8x128xf32> to vector<8x32xf32>
    %35 = arith.negf %34 : vector<8x32xf32>
    %36 = math.exp %35 : vector<8x32xf32>
    %cst_20 = arith.constant 1.000000e+00 : f32
    %37 = vector.broadcast %cst_20 : f32 to vector<8x32xf32>
    %38 = arith.addf %37, %36 : vector<8x32xf32>
    %39 = arith.divf %37, %38 : vector<8x32xf32>
    %40 = arith.mulf %31, %13 : vector<8x32xf32>
    %41 = arith.mulf %25, %33 : vector<8x32xf32>
    %42 = arith.addf %40, %41 : vector<8x32xf32>
    %43 = math.tanh %42 : vector<8x32xf32>
    %44 = arith.mulf %39, %43 : vector<8x32xf32>
    %45 = arith.index_cast %15 : i32 to index
    %c0_21 = arith.constant 0 : index
    %46 = vector.load %arg12[%45, %c0_21] : memref<64x32xf32, #tpu.memory_space<vmem>>, vector<8x32xf32>
    tpu.vector_store %arg12[%45, %c0_21], %44 {strides = array<i32>} : memref<64x32xf32, #tpu.memory_space<vmem>>, vector<8x32xf32>,
    %c1_i32 = arith.constant 1 : i32
    %c8_i32_22 = arith.constant 8 : i32
    %47 = arith.muli %c1_i32, %c8_i32_22 : i32
    %48 = tpu.assume_multiple %47, 8 : i32
    %49 = arith.index_cast %48 : i32 to index
    %c0_23 = arith.constant 0 : index
    %50 = vector.load %arg11[%49, %c0_23] : memref<64x128xf32, #tpu.memory_space<vmem>>, vector<8x128xf32>
    %cst_24 = arith.constant dense<0.000000e+00> : vector<8x128xf32>
    %51 = tpu.matmul %44, %11, %cst_24 {dimension_numbers = #tpu.dot_dimension_numbers<[1], [0], [0], [1], [0, 0, 1, 1], [], []>} : vector<8x32xf32>, vector<32x128xf32>, vector<8x128xf32> -> vector<8x128xf32>
    %52 = arith.addf %50, %51 : vector<8x128xf32>
    %53 = vector.extract_strided_slice %52 {offsets = [0, 0], sizes = [8, 32], strides = [1, 1]} : vector<8x128xf32> to vector<8x32xf32>
    %54 = arith.negf %53 : vector<8x32xf32>
    %55 = math.exp %54 : vector<8x32xf32>
    %cst_25 = arith.constant 1.000000e+00 : f32
    %56 = vector.broadcast %cst_25 : f32 to vector<8x32xf32>
    %57 = arith.addf %56, %55 : vector<8x32xf32>
    %58 = arith.divf %56, %57 : vector<8x32xf32>
    %59 = vector.extract_strided_slice %52 {offsets = [0, 32], sizes = [8, 32], strides = [1, 1]} : vector<8x128xf32> to vector<8x32xf32>
    %60 = arith.negf %59 : vector<8x32xf32>
    %61 = math.exp %60 : vector<8x32xf32>
    %cst_26 = arith.constant 1.000000e+00 : f32
    %62 = vector.broadcast %cst_26 : f32 to vector<8x32xf32>
    %63 = arith.addf %62, %61 : vector<8x32xf32>
    %64 = arith.divf %62, %63 : vector<8x32xf32>
    %65 = vector.extract_strided_slice %52 {offsets = [0, 64], sizes = [8, 32], strides = [1, 1]} : vector<8x128xf32> to vector<8x32xf32>
    %66 = math.tanh %65 : vector<8x32xf32>
    %67 = vector.extract_strided_slice %52 {offsets = [0, 96], sizes = [8, 32], strides = [1, 1]} : vector<8x128xf32> to vector<8x32xf32>
    %68 = arith.negf %67 : vector<8x32xf32>
    %69 = math.exp %68 : vector<8x32xf32>
    %cst_27 = arith.constant 1.000000e+00 : f32
    %70 = vector.broadcast %cst_27 : f32 to vector<8x32xf32>
    %71 = arith.addf %70, %69 : vector<8x32xf32>
    %72 = arith.divf %70, %71 : vector<8x32xf32>
    %73 = arith.mulf %64, %42 : vector<8x32xf32>
    %74 = arith.mulf %58, %66 : vector<8x32xf32>
    %75 = arith.addf %73, %74 : vector<8x32xf32>
    %76 = math.tanh %75 : vector<8x32xf32>
    %77 = arith.mulf %72, %76 : vector<8x32xf32>
    %78 = arith.index_cast %48 : i32 to index
    %c0_28 = arith.constant 0 : index
    %79 = vector.load %arg12[%78, %c0_28] : memref<64x32xf32, #tpu.memory_space<vmem>>, vector<8x32xf32>
    tpu.vector_store %arg12[%78, %c0_28], %77 {strides = array<i32>} : memref<64x32xf32, #tpu.memory_space<vmem>>, vector<8x32xf32>,
    %c2_i32 = arith.constant 2 : i32
    %c8_i32_29 = arith.constant 8 : i32
    %80 = arith.muli %c2_i32, %c8_i32_29 : i32
    %81 = tpu.assume_multiple %80, 8 : i32
    %82 = arith.index_cast %81 : i32 to index
    %c0_30 = arith.constant 0 : index
    %83 = vector.load %arg11[%82, %c0_30] : memref<64x128xf32, #tpu.memory_space<vmem>>, vector<8x128xf32>
    %cst_31 = arith.constant dense<0.000000e+00> : vector<8x128xf32>
    %84 = tpu.matmul %77, %11, %cst_31 {dimension_numbers = #tpu.dot_dimension_numbers<[1], [0], [0], [1], [0, 0, 1, 1], [], []>} : vector<8x32xf32>, vector<32x128xf32>, vector<8x128xf32> -> vector<8x128xf32>
    %85 = arith.addf %83, %84 : vector<8x128xf32>
    %86 = vector.extract_strided_slice %85 {offsets = [0, 0], sizes = [8, 32], strides = [1, 1]} : vector<8x128xf32> to vector<8x32xf32>
    %87 = arith.negf %86 : vector<8x32xf32>
    %88 = math.exp %87 : vector<8x32xf32>
    %cst_32 = arith.constant 1.000000e+00 : f32
    %89 = vector.broadcast %cst_32 : f32 to vector<8x32xf32>
    %90 = arith.addf %89, %88 : vector<8x32xf32>
    %91 = arith.divf %89, %90 : vector<8x32xf32>
    %92 = vector.extract_strided_slice %85 {offsets = [0, 32], sizes = [8, 32], strides = [1, 1]} : vector<8x128xf32> to vector<8x32xf32>
    %93 = arith.negf %92 : vector<8x32xf32>
    %94 = math.exp %93 : vector<8x32xf32>
    %cst_33 = arith.constant 1.000000e+00 : f32
    %95 = vector.broadcast %cst_33 : f32 to vector<8x32xf32>
    %96 = arith.addf %95, %94 : vector<8x32xf32>
    %97 = arith.divf %95, %96 : vector<8x32xf32>
    %98 = vector.extract_strided_slice %85 {offsets = [0, 64], sizes = [8, 32], strides = [1, 1]} : vector<8x128xf32> to vector<8x32xf32>
    %99 = math.tanh %98 : vector<8x32xf32>
    %100 = vector.extract_strided_slice %85 {offsets = [0, 96], sizes = [8, 32], strides = [1, 1]} : vector<8x128xf32> to vector<8x32xf32>
    %101 = arith.negf %100 : vector<8x32xf32>
    %102 = math.exp %101 : vector<8x32xf32>
    %cst_34 = arith.constant 1.000000e+00 : f32
    %103 = vector.broadcast %cst_34 : f32 to vector<8x32xf32>
    %104 = arith.addf %103, %102 : vector<8x32xf32>
    %105 = arith.divf %103, %104 : vector<8x32xf32>
    %106 = arith.mulf %97, %75 : vector<8x32xf32>
    %107 = arith.mulf %91, %99 : vector<8x32xf32>
    %108 = arith.addf %106, %107 : vector<8x32xf32>
    %109 = math.tanh %108 : vector<8x32xf32>
    %110 = arith.mulf %105, %109 : vector<8x32xf32>
    %111 = arith.index_cast %81 : i32 to index
    %c0_35 = arith.constant 0 : index
    %112 = vector.load %arg12[%111, %c0_35] : memref<64x32xf32, #tpu.memory_space<vmem>>, vector<8x32xf32>
    tpu.vector_store %arg12[%111, %c0_35], %110 {strides = array<i32>} : memref<64x32xf32, #tpu.memory_space<vmem>>, vector<8x32xf32>,
    %c3_i32 = arith.constant 3 : i32
    %c8_i32_36 = arith.constant 8 : i32
    %113 = arith.muli %c3_i32, %c8_i32_36 : i32
    %114 = tpu.assume_multiple %113, 8 : i32
    %115 = arith.index_cast %114 : i32 to index
    %c0_37 = arith.constant 0 : index
    %116 = vector.load %arg11[%115, %c0_37] : memref<64x128xf32, #tpu.memory_space<vmem>>, vector<8x128xf32>
    %cst_38 = arith.constant dense<0.000000e+00> : vector<8x128xf32>
    %117 = tpu.matmul %110, %11, %cst_38 {dimension_numbers = #tpu.dot_dimension_numbers<[1], [0], [0], [1], [0, 0, 1, 1], [], []>} : vector<8x32xf32>, vector<32x128xf32>, vector<8x128xf32> -> vector<8x128xf32>
    %118 = arith.addf %116, %117 : vector<8x128xf32>
    %119 = vector.extract_strided_slice %118 {offsets = [0, 0], sizes = [8, 32], strides = [1, 1]} : vector<8x128xf32> to vector<8x32xf32>
    %120 = arith.negf %119 : vector<8x32xf32>
    %121 = math.exp %120 : vector<8x32xf32>
    %cst_39 = arith.constant 1.000000e+00 : f32
    %122 = vector.broadcast %cst_39 : f32 to vector<8x32xf32>
    %123 = arith.addf %122, %121 : vector<8x32xf32>
    %124 = arith.divf %122, %123 : vector<8x32xf32>
    %125 = vector.extract_strided_slice %118 {offsets = [0, 32], sizes = [8, 32], strides = [1, 1]} : vector<8x128xf32> to vector<8x32xf32>
    %126 = arith.negf %125 : vector<8x32xf32>
    %127 = math.exp %126 : vector<8x32xf32>
    %cst_40 = arith.constant 1.000000e+00 : f32
    %128 = vector.broadcast %cst_40 : f32 to vector<8x32xf32>
    %129 = arith.addf %128, %127 : vector<8x32xf32>
    %130 = arith.divf %128, %129 : vector<8x32xf32>
    %131 = vector.extract_strided_slice %118 {offsets = [0, 64], sizes = [8, 32], strides = [1, 1]} : vector<8x128xf32> to vector<8x32xf32>
    %132 = math.tanh %131 : vector<8x32xf32>
    %133 = vector.extract_strided_slice %118 {offsets = [0, 96], sizes = [8, 32], strides = [1, 1]} : vector<8x128xf32> to vector<8x32xf32>
    %134 = arith.negf %133 : vector<8x32xf32>
    %135 = math.exp %134 : vector<8x32xf32>
    %cst_41 = arith.constant 1.000000e+00 : f32
    %136 = vector.broadcast %cst_41 : f32 to vector<8x32xf32>
    %137 = arith.addf %136, %135 : vector<8x32xf32>
    %138 = arith.divf %136, %137 : vector<8x32xf32>
    %139 = arith.mulf %130, %108 : vector<8x32xf32>
    %140 = arith.mulf %124, %132 : vector<8x32xf32>
    %141 = arith.addf %139, %140 : vector<8x32xf32>
    %142 = math.tanh %141 : vector<8x32xf32>
    %143 = arith.mulf %138, %142 : vector<8x32xf32>
    %144 = arith.index_cast %114 : i32 to index
    %c0_42 = arith.constant 0 : index
    %145 = vector.load %arg12[%144, %c0_42] : memref<64x32xf32, #tpu.memory_space<vmem>>, vector<8x32xf32>
    tpu.vector_store %arg12[%144, %c0_42], %143 {strides = array<i32>} : memref<64x32xf32, #tpu.memory_space<vmem>>, vector<8x32xf32>,
    %c4_i32 = arith.constant 4 : i32
    %c8_i32_43 = arith.constant 8 : i32
    %146 = arith.muli %c4_i32, %c8_i32_43 : i32
    %147 = tpu.assume_multiple %146, 8 : i32
    %148 = arith.index_cast %147 : i32 to index
    %c0_44 = arith.constant 0 : index
    %149 = vector.load %arg11[%148, %c0_44] : memref<64x128xf32, #tpu.memory_space<vmem>>, vector<8x128xf32>
    %cst_45 = arith.constant dense<0.000000e+00> : vector<8x128xf32>
    %150 = tpu.matmul %143, %11, %cst_45 {dimension_numbers = #tpu.dot_dimension_numbers<[1], [0], [0], [1], [0, 0, 1, 1], [], []>} : vector<8x32xf32>, vector<32x128xf32>, vector<8x128xf32> -> vector<8x128xf32>
    %151 = arith.addf %149, %150 : vector<8x128xf32>
    %152 = vector.extract_strided_slice %151 {offsets = [0, 0], sizes = [8, 32], strides = [1, 1]} : vector<8x128xf32> to vector<8x32xf32>
    %153 = arith.negf %152 : vector<8x32xf32>
    %154 = math.exp %153 : vector<8x32xf32>
    %cst_46 = arith.constant 1.000000e+00 : f32
    %155 = vector.broadcast %cst_46 : f32 to vector<8x32xf32>
    %156 = arith.addf %155, %154 : vector<8x32xf32>
    %157 = arith.divf %155, %156 : vector<8x32xf32>
    %158 = vector.extract_strided_slice %151 {offsets = [0, 32], sizes = [8, 32], strides = [1, 1]} : vector<8x128xf32> to vector<8x32xf32>
    %159 = arith.negf %158 : vector<8x32xf32>
    %160 = math.exp %159 : vector<8x32xf32>
    %cst_47 = arith.constant 1.000000e+00 : f32
    %161 = vector.broadcast %cst_47 : f32 to vector<8x32xf32>
    %162 = arith.addf %161, %160 : vector<8x32xf32>
    %163 = arith.divf %161, %162 : vector<8x32xf32>
    %164 = vector.extract_strided_slice %151 {offsets = [0, 64], sizes = [8, 32], strides = [1, 1]} : vector<8x128xf32> to vector<8x32xf32>
    %165 = math.tanh %164 : vector<8x32xf32>
    %166 = vector.extract_strided_slice %151 {offsets = [0, 96], sizes = [8, 32], strides = [1, 1]} : vector<8x128xf32> to vector<8x32xf32>
    %167 = arith.negf %166 : vector<8x32xf32>
    %168 = math.exp %167 : vector<8x32xf32>
    %cst_48 = arith.constant 1.000000e+00 : f32
    %169 = vector.broadcast %cst_48 : f32 to vector<8x32xf32>
    %170 = arith.addf %169, %168 : vector<8x32xf32>
    %171 = arith.divf %169, %170 : vector<8x32xf32>
    %172 = arith.mulf %163, %141 : vector<8x32xf32>
    %173 = arith.mulf %157, %165 : vector<8x32xf32>
    %174 = arith.addf %172, %173 : vector<8x32xf32>
    %175 = math.tanh %174 : vector<8x32xf32>
    %176 = arith.mulf %171, %175 : vector<8x32xf32>
    %177 = arith.index_cast %147 : i32 to index
    %c0_49 = arith.constant 0 : index
    %178 = vector.load %arg12[%177, %c0_49] : memref<64x32xf32, #tpu.memory_space<vmem>>, vector<8x32xf32>
    tpu.vector_store %arg12[%177, %c0_49], %176 {strides = array<i32>} : memref<64x32xf32, #tpu.memory_space<vmem>>, vector<8x32xf32>,
    %c5_i32 = arith.constant 5 : i32
    %c8_i32_50 = arith.constant 8 : i32
    %179 = arith.muli %c5_i32, %c8_i32_50 : i32
    %180 = tpu.assume_multiple %179, 8 : i32
    %181 = arith.index_cast %180 : i32 to index
    %c0_51 = arith.constant 0 : index
    %182 = vector.load %arg11[%181, %c0_51] : memref<64x128xf32, #tpu.memory_space<vmem>>, vector<8x128xf32>
    %cst_52 = arith.constant dense<0.000000e+00> : vector<8x128xf32>
    %183 = tpu.matmul %176, %11, %cst_52 {dimension_numbers = #tpu.dot_dimension_numbers<[1], [0], [0], [1], [0, 0, 1, 1], [], []>} : vector<8x32xf32>, vector<32x128xf32>, vector<8x128xf32> -> vector<8x128xf32>
    %184 = arith.addf %182, %183 : vector<8x128xf32>
    %185 = vector.extract_strided_slice %184 {offsets = [0, 0], sizes = [8, 32], strides = [1, 1]} : vector<8x128xf32> to vector<8x32xf32>
    %186 = arith.negf %185 : vector<8x32xf32>
    %187 = math.exp %186 : vector<8x32xf32>
    %cst_53 = arith.constant 1.000000e+00 : f32
    %188 = vector.broadcast %cst_53 : f32 to vector<8x32xf32>
    %189 = arith.addf %188, %187 : vector<8x32xf32>
    %190 = arith.divf %188, %189 : vector<8x32xf32>
    %191 = vector.extract_strided_slice %184 {offsets = [0, 32], sizes = [8, 32], strides = [1, 1]} : vector<8x128xf32> to vector<8x32xf32>
    %192 = arith.negf %191 : vector<8x32xf32>
    %193 = math.exp %192 : vector<8x32xf32>
    %cst_54 = arith.constant 1.000000e+00 : f32
    %194 = vector.broadcast %cst_54 : f32 to vector<8x32xf32>
    %195 = arith.addf %194, %193 : vector<8x32xf32>
    %196 = arith.divf %194, %195 : vector<8x32xf32>
    %197 = vector.extract_strided_slice %184 {offsets = [0, 64], sizes = [8, 32], strides = [1, 1]} : vector<8x128xf32> to vector<8x32xf32>
    %198 = math.tanh %197 : vector<8x32xf32>
    %199 = vector.extract_strided_slice %184 {offsets = [0, 96], sizes = [8, 32], strides = [1, 1]} : vector<8x128xf32> to vector<8x32xf32>
    %200 = arith.negf %199 : vector<8x32xf32>
    %201 = math.exp %200 : vector<8x32xf32>
    %cst_55 = arith.constant 1.000000e+00 : f32
    %202 = vector.broadcast %cst_55 : f32 to vector<8x32xf32>
    %203 = arith.addf %202, %201 : vector<8x32xf32>
    %204 = arith.divf %202, %203 : vector<8x32xf32>
    %205 = arith.mulf %196, %174 : vector<8x32xf32>
    %206 = arith.mulf %190, %198 : vector<8x32xf32>
    %207 = arith.addf %205, %206 : vector<8x32xf32>
    %208 = math.tanh %207 : vector<8x32xf32>
    %209 = arith.mulf %204, %208 : vector<8x32xf32>
    %210 = arith.index_cast %180 : i32 to index
    %c0_56 = arith.constant 0 : index
    %211 = vector.load %arg12[%210, %c0_56] : memref<64x32xf32, #tpu.memory_space<vmem>>, vector<8x32xf32>
    tpu.vector_store %arg12[%210, %c0_56], %209 {strides = array<i32>} : memref<64x32xf32, #tpu.memory_space<vmem>>, vector<8x32xf32>,
    %c6_i32 = arith.constant 6 : i32
    %c8_i32_57 = arith.constant 8 : i32
    %212 = arith.muli %c6_i32, %c8_i32_57 : i32
    %213 = tpu.assume_multiple %212, 8 : i32
    %214 = arith.index_cast %213 : i32 to index
    %c0_58 = arith.constant 0 : index
    %215 = vector.load %arg11[%214, %c0_58] : memref<64x128xf32, #tpu.memory_space<vmem>>, vector<8x128xf32>
    %cst_59 = arith.constant dense<0.000000e+00> : vector<8x128xf32>
    %216 = tpu.matmul %209, %11, %cst_59 {dimension_numbers = #tpu.dot_dimension_numbers<[1], [0], [0], [1], [0, 0, 1, 1], [], []>} : vector<8x32xf32>, vector<32x128xf32>, vector<8x128xf32> -> vector<8x128xf32>
    %217 = arith.addf %215, %216 : vector<8x128xf32>
    %218 = vector.extract_strided_slice %217 {offsets = [0, 0], sizes = [8, 32], strides = [1, 1]} : vector<8x128xf32> to vector<8x32xf32>
    %219 = arith.negf %218 : vector<8x32xf32>
    %220 = math.exp %219 : vector<8x32xf32>
    %cst_60 = arith.constant 1.000000e+00 : f32
    %221 = vector.broadcast %cst_60 : f32 to vector<8x32xf32>
    %222 = arith.addf %221, %220 : vector<8x32xf32>
    %223 = arith.divf %221, %222 : vector<8x32xf32>
    %224 = vector.extract_strided_slice %217 {offsets = [0, 32], sizes = [8, 32], strides = [1, 1]} : vector<8x128xf32> to vector<8x32xf32>
    %225 = arith.negf %224 : vector<8x32xf32>
    %226 = math.exp %225 : vector<8x32xf32>
    %cst_61 = arith.constant 1.000000e+00 : f32
    %227 = vector.broadcast %cst_61 : f32 to vector<8x32xf32>
    %228 = arith.addf %227, %226 : vector<8x32xf32>
    %229 = arith.divf %227, %228 : vector<8x32xf32>
    %230 = vector.extract_strided_slice %217 {offsets = [0, 64], sizes = [8, 32], strides = [1, 1]} : vector<8x128xf32> to vector<8x32xf32>
    %231 = math.tanh %230 : vector<8x32xf32>
    %232 = vector.extract_strided_slice %217 {offsets = [0, 96], sizes = [8, 32], strides = [1, 1]} : vector<8x128xf32> to vector<8x32xf32>
    %233 = arith.negf %232 : vector<8x32xf32>
    %234 = math.exp %233 : vector<8x32xf32>
    %cst_62 = arith.constant 1.000000e+00 : f32
    %235 = vector.broadcast %cst_62 : f32 to vector<8x32xf32>
    %236 = arith.addf %235, %234 : vector<8x32xf32>
    %237 = arith.divf %235, %236 : vector<8x32xf32>
    %238 = arith.mulf %229, %207 : vector<8x32xf32>
    %239 = arith.mulf %223, %231 : vector<8x32xf32>
    %240 = arith.addf %238, %239 : vector<8x32xf32>
    %241 = math.tanh %240 : vector<8x32xf32>
    %242 = arith.mulf %237, %241 : vector<8x32xf32>
    %243 = arith.index_cast %213 : i32 to index
    %c0_63 = arith.constant 0 : index
    %244 = vector.load %arg12[%243, %c0_63] : memref<64x32xf32, #tpu.memory_space<vmem>>, vector<8x32xf32>
    tpu.vector_store %arg12[%243, %c0_63], %242 {strides = array<i32>} : memref<64x32xf32, #tpu.memory_space<vmem>>, vector<8x32xf32>,
    %c7_i32 = arith.constant 7 : i32
    %c8_i32_64 = arith.constant 8 : i32
    %245 = arith.muli %c7_i32, %c8_i32_64 : i32
    %246 = tpu.assume_multiple %245, 8 : i32
    %247 = arith.index_cast %246 : i32 to index
    %c0_65 = arith.constant 0 : index
    %248 = vector.load %arg11[%247, %c0_65] : memref<64x128xf32, #tpu.memory_space<vmem>>, vector<8x128xf32>
    %cst_66 = arith.constant dense<0.000000e+00> : vector<8x128xf32>
    %249 = tpu.matmul %242, %11, %cst_66 {dimension_numbers = #tpu.dot_dimension_numbers<[1], [0], [0], [1], [0, 0, 1, 1], [], []>} : vector<8x32xf32>, vector<32x128xf32>, vector<8x128xf32> -> vector<8x128xf32>
    %250 = arith.addf %248, %249 : vector<8x128xf32>
    %251 = vector.extract_strided_slice %250 {offsets = [0, 0], sizes = [8, 32], strides = [1, 1]} : vector<8x128xf32> to vector<8x32xf32>
    %252 = arith.negf %251 : vector<8x32xf32>
    %253 = math.exp %252 : vector<8x32xf32>
    %cst_67 = arith.constant 1.000000e+00 : f32
    %254 = vector.broadcast %cst_67 : f32 to vector<8x32xf32>
    %255 = arith.addf %254, %253 : vector<8x32xf32>
    %256 = arith.divf %254, %255 : vector<8x32xf32>
    %257 = vector.extract_strided_slice %250 {offsets = [0, 32], sizes = [8, 32], strides = [1, 1]} : vector<8x128xf32> to vector<8x32xf32>
    %258 = arith.negf %257 : vector<8x32xf32>
    %259 = math.exp %258 : vector<8x32xf32>
    %cst_68 = arith.constant 1.000000e+00 : f32
    %260 = vector.broadcast %cst_68 : f32 to vector<8x32xf32>
    %261 = arith.addf %260, %259 : vector<8x32xf32>
    %262 = arith.divf %260, %261 : vector<8x32xf32>
    %263 = vector.extract_strided_slice %250 {offsets = [0, 64], sizes = [8, 32], strides = [1, 1]} : vector<8x128xf32> to vector<8x32xf32>
    %264 = math.tanh %263 : vector<8x32xf32>
    %265 = vector.extract_strided_slice %250 {offsets = [0, 96], sizes = [8, 32], strides = [1, 1]} : vector<8x128xf32> to vector<8x32xf32>
    %266 = arith.negf %265 : vector<8x32xf32>
    %267 = math.exp %266 : vector<8x32xf32>
    %cst_69 = arith.constant 1.000000e+00 : f32
    %268 = vector.broadcast %cst_69 : f32 to vector<8x32xf32>
    %269 = arith.addf %268, %267 : vector<8x32xf32>
    %270 = arith.divf %268, %269 : vector<8x32xf32>
    %271 = arith.mulf %262, %240 : vector<8x32xf32>
    %272 = arith.mulf %256, %264 : vector<8x32xf32>
    %273 = arith.addf %271, %272 : vector<8x32xf32>
    %274 = math.tanh %273 : vector<8x32xf32>
    %275 = arith.mulf %270, %274 : vector<8x32xf32>
    %276 = arith.index_cast %246 : i32 to index
    %c0_70 = arith.constant 0 : index
    %277 = vector.load %arg12[%276, %c0_70] : memref<64x32xf32, #tpu.memory_space<vmem>>, vector<8x32xf32>
    tpu.vector_store %arg12[%276, %c0_70], %275 {strides = array<i32>} : memref<64x32xf32, #tpu.memory_space<vmem>>, vector<8x32xf32>,
    %c8_i32_71 = arith.constant 8 : i32
    %c0_72 = arith.constant 0 : index
    %c0_73 = arith.constant 0 : index
    %278 = vector.load %arg9[%c0_72, %c0_73] : memref<8x32xf32, #tpu.memory_space<vmem>>, vector<8x32xf32>
    tpu.vector_store %arg9[%c0_72, %c0_73], %275 {strides = array<i32>} : memref<8x32xf32, #tpu.memory_space<vmem>>, vector<8x32xf32>,
    %c0_74 = arith.constant 0 : index
    %c0_75 = arith.constant 0 : index
    %279 = vector.load %arg10[%c0_74, %c0_75] : memref<8x32xf32, #tpu.memory_space<vmem>>, vector<8x32xf32>
    tpu.vector_store %arg10[%c0_74, %c0_75], %273 {strides = array<i32>} : memref<8x32xf32, #tpu.memory_space<vmem>>, vector<8x32xf32>,
    %c0_76 = arith.constant 0 : index
    %c0_77 = arith.constant 0 : index
    %280 = vector.load %arg12[%c0_76, %c0_77] : memref<64x32xf32, #tpu.memory_space<vmem>>, vector<64x32xf32>
    %c0_78 = arith.constant 0 : index
    %c0_79 = arith.constant 0 : index
    %281 = vector.load %arg6[%c0_78, %c0_79] : memref<32x4xf32, #tpu.memory_space<vmem>>, vector<32x4xf32>
    %cst_80 = arith.constant dense<0.000000e+00> : vector<64x4xf32>
    %282 = tpu.matmul %280, %281, %cst_80 {dimension_numbers = #tpu.dot_dimension_numbers<[1], [0], [0], [1], [0, 0, 1, 1], [], []>} : vector<64x32xf32>, vector<32x4xf32>, vector<64x4xf32> -> vector<64x4xf32>
    %c0_81 = arith.constant 0 : index
    %c0_82 = arith.constant 0 : index
    %283 = vector.load %arg7[%c0_81, %c0_82] : memref<1x4xf32, #tpu.memory_space<vmem>>, vector<1x4xf32>
    %284 = vector.broadcast %283 : vector<1x4xf32> to vector<64x4xf32>
    %285 = arith.addf %282, %284 : vector<64x4xf32>
    %cst_83 = arith.constant dense<0xFF800000> : vector<64xf32>
    %286 = vector.multi_reduction <maximumf>, %285, %cst_83 [1] : vector<64x4xf32> to vector<64xf32>
    %287 = vector.shape_cast %286 : vector<64xf32> to vector<64x1xf32>
    %288 = vector.broadcast %287 : vector<64x1xf32> to vector<64x4xf32>
    %289 = arith.subf %285, %288 : vector<64x4xf32>
    %290 = math.exp %289 : vector<64x4xf32>
    %cst_84 = arith.constant dense<0.000000e+00> : vector<64xf32>
    %291 = vector.multi_reduction <add>, %290, %cst_84 [1] : vector<64x4xf32> to vector<64xf32>
    %292 = vector.shape_cast %291 : vector<64xf32> to vector<64x1xf32>
    %293 = tpu.reciprocal %292 {approx = true} : vector<64x1xf32> -> vector<64x1xf32>
    %294 = vector.broadcast %293 : vector<64x1xf32> to vector<64x4xf32>
    %295 = arith.mulf %290, %294 : vector<64x4xf32>
    %c0_85 = arith.constant 0 : index
    %c0_86 = arith.constant 0 : index
    %c0_87 = arith.constant 0 : index
    %296 = vector.load %arg8[%c0_85, %c0_86, %c0_87] : memref<1x64x4xf32, #tpu.memory_space<vmem>>, vector<1x64x4xf32>
    %297 = vector.shape_cast %296 : vector<1x64x4xf32> to vector<64x4xf32>
    %298 = vector.shape_cast %295 : vector<64x4xf32> to vector<1x64x4xf32>
    tpu.vector_store %arg8[%c0_85, %c0_86, %c0_87], %298 {strides = array<i32>} : memref<1x64x4xf32, #tpu.memory_space<vmem>>, vector<1x64x4xf32>,
    return
  }
  func.func @transform_0(%arg0: i32, %arg1: i32) -> (i32, i32, i32) {
    %c0_i32 = arith.constant 0 : i32
    %c0_i32_0 = arith.constant 0 : i32
    return %arg0, %arg1, %c0_i32 : i32, i32, i32
  }
  func.func @transform_1(%arg0: i32, %arg1: i32) -> (i32, i32) {
    %c0_i32 = arith.constant 0 : i32
    %c0_i32_0 = arith.constant 0 : i32
    %c0_i32_1 = arith.constant 0 : i32
    return %c0_i32, %c0_i32_0 : i32, i32
  }
  func.func @transform_2(%arg0: i32, %arg1: i32) -> (i32, i32) {
    %c0_i32 = arith.constant 0 : i32
    %c0_i32_0 = arith.constant 0 : i32
    %c0_i32_1 = arith.constant 0 : i32
    return %c0_i32, %c0_i32_0 : i32, i32
  }
  func.func @transform_3(%arg0: i32, %arg1: i32) -> (i32, i32) {
    %c0_i32 = arith.constant 0 : i32
    %c0_i32_0 = arith.constant 0 : i32
    %c0_i32_1 = arith.constant 0 : i32
    return %c0_i32, %c0_i32_0 : i32, i32
  }
  func.func @transform_4(%arg0: i32, %arg1: i32) -> (i32, i32) {
    %c0_i32 = arith.constant 0 : i32
    %c0_i32_0 = arith.constant 0 : i32
    %c0_i32_1 = arith.constant 0 : i32
    return %c0_i32, %c0_i32_0 : i32, i32
  }
  func.func @transform_5(%arg0: i32, %arg1: i32) -> (i32, i32) {
    %c0_i32 = arith.constant 0 : i32
    %c0_i32_0 = arith.constant 0 : i32
    %c0_i32_1 = arith.constant 0 : i32
    return %c0_i32, %c0_i32_0 : i32, i32
  }
  func.func @transform_6(%arg0: i32, %arg1: i32) -> (i32, i32, i32) {
    %c0_i32 = arith.constant 0 : i32
    %c0_i32_0 = arith.constant 0 : i32
    return %arg0, %arg1, %c0_i32 : i32, i32, i32
  }
}

</mosaic_0001>

<llo_original>
// kernel: tpu_custom_call.1
$region0: #{tpu_custom_call.1}
  #allocation0 [shape = 'u32[]', space=smem, size = 0x4, offset = 0x4, fixed_abs, tag = 'smem constant byte address 0x4 - core index']
  #allocation1 [shape = 'u32[144,128]{1,0:T(1,128)}', space=vmem, size = 0x12000, scoped, tag = 'internal scratch']
  #allocation2 [shape = 'f32[8,32]{1,0:T(8,128)}', space=vmem, size = 0x1000, scoped, tag = 'scratch operand']
  #allocation3 [shape = 'f32[8,32]{1,0:T(8,128)}', space=vmem, size = 0x1000, scoped, tag = 'scratch operand']
  #allocation4 [shape = 'f32[64,128]{1,0:T(8,128)}', space=vmem, size = 0x8000, scoped, tag = 'scratch operand']
  #allocation5 [shape = 'f32[64,32]{1,0:T(8,128)}', space=vmem, size = 0x8000, scoped, tag = 'scratch operand']
  %s0 = inlined_call_operand.vmem [shape: f32[1,64,16], index: 0, kind: input, shape index: {}]
  %s1 = inlined_call_operand.vmem [shape: f32[16,128], index: 1, kind: input, shape index: {}]
  %s2 = inlined_call_operand.vmem [shape: f32[32,128], index: 2, kind: input, shape index: {}]
  %s3 = inlined_call_operand.vmem [shape: f32[1,128], index: 3, kind: input, shape index: {}]
  %s4 = inlined_call_operand.vmem [shape: f32[32,4], index: 4, kind: input, shape index: {}]
  %s5 = inlined_call_operand.vmem [shape: f32[1,4], index: 5, kind: input, shape index: {}]
  %s6 = inlined_call_operand.vmem [shape: f32[1,64,4], index: 6, kind: output, shape index: {}]
  %s7 = sld [smem:[#allocation0]]
  $region38: #{tpu_custom_call.1} parent=0
    _
  %s9 = ssub.s32 1, %s7
  %s10 = scalar_select 0, %s9, %s7
  // Predicated region
  $region2: #{tpu_custom_call.1} parent=0 // pred_check
    _
  $region3: #{tpu_custom_call.1} parent=0 // pred_check_branch
    %12 = sbr.rel (0) target = $region5
  $region4: #{tpu_custom_call.1} parent=0 // pred_region
    _
  $region5: #{tpu_custom_call.1} parent=0 // pred_fallthru
    _
  // Predicated region
  $region6: #{tpu_custom_call.1} parent=0 // pred_check
    _
  $region7: #{tpu_custom_call.1} parent=0 // pred_check_branch
    %14 = sbr.rel (0) target = $region9
  $region8: #{tpu_custom_call.1} parent=0 // pred_region
    _
  $region9: #{tpu_custom_call.1} parent=0 // pred_fallthru
    _
  // Predicated region
  $region10: #{tpu_custom_call.1} parent=0 // pred_check
    _
  $region11: #{tpu_custom_call.1} parent=0 // pred_check_branch
    %16 = sbr.rel (0) target = $region13
  $region12: #{tpu_custom_call.1} parent=0 // pred_region
    _
  $region13: #{tpu_custom_call.1} parent=0 // pred_fallthru
    _
  // Predicated region
  $region14: #{tpu_custom_call.1} parent=0 // pred_check
    _
  $region15: #{tpu_custom_call.1} parent=0 // pred_check_branch
    %18 = sbr.rel (0) target = $region17
  $region16: #{tpu_custom_call.1} parent=0 // pred_region
    _
  $region17: #{tpu_custom_call.1} parent=0 // pred_fallthru
    _
  // Predicated region
  $region18: #{tpu_custom_call.1} parent=0 // pred_check
    _
  $region19: #{tpu_custom_call.1} parent=0 // pred_check_branch
    %20 = sbr.rel (0) target = $region21
  $region20: #{tpu_custom_call.1} parent=0 // pred_region
    _
  $region21: #{tpu_custom_call.1} parent=0 // pred_fallthru
    _
  // Predicated region
  $region22: #{tpu_custom_call.1} parent=0 // pred_check
    _
  $region23: #{tpu_custom_call.1} parent=0 // pred_check_branch
    %22 = sbr.rel (0) target = $region25
  $region24: #{tpu_custom_call.1} parent=0 // pred_region
    _
  $region25: #{tpu_custom_call.1} parent=0 // pred_fallthru
    _
  %p23 = scmp.eq.s32.totalorder 0, 0
  // Predicated region
  $region26: #{tpu_custom_call.1} parent=0 // pred_check
    %p24 = pneg %p23
  $region27: #{tpu_custom_call.1} parent=0 // pred_check_branch
    %26 = sbr.rel (%p24) target = $region29
  $region28: #{tpu_custom_call.1} parent=0 // pred_region
    %vm27 = vcmask 261120
    %28 = vst.msk [vmem:[#allocation2] sm:$0xff] %vm27, 0.0
    %29 = vst.msk [vmem:[#allocation3] sm:$0xff] %vm27, 0.0
  $region29: #{tpu_custom_call.1} parent=0 // pred_fallthru
    _
  %v30 = vld [vmem:[%s0] sm:$0xff]
  %v31 = vld [vmem:[%s0 + $0x8] sm:$0xff]
  %v32 = vld [vmem:[%s0 + $0x10] sm:$0xff]
  %v33 = vld [vmem:[%s0 + $0x18] sm:$0xff]
  %v34 = vld [vmem:[%s0 + $0x20] sm:$0xff]
  %v35 = vld [vmem:[%s0 + $0x28] sm:$0xff]
  %v36 = vld [vmem:[%s0 + $0x30] sm:$0xff]
  %v37 = vld [vmem:[%s0 + $0x38] sm:$0xff]
  %v38 = vld [vmem:[%s1] sm:$0xff]
  %v39 = vld [vmem:[%s1 + $0x8] sm:$0xff]
  %v40 = vld [vmem:[%s3] sm:$0x1]
  %v42 = vlaneseq
  %v43 = vshrl.u32 %v42, 7
  %v44 = vsub.s32 0, %v43
  %v45 = vrot.slane %v40, %v44
  %vm47 = vcmask 130048
  %v49 = vsel %vm47, %v30, 0
  %v52 = vsel %vm47, %v31, 0
  %v55 = vsel %vm47, %v32, 0
  %v58 = vsel %vm47, %v33, 0
  %v61 = vsel %vm47, %v34, 0
  %v64 = vsel %vm47, %v35, 0
  %v67 = vsel %vm47, %v36, 0
  %v70 = vsel %vm47, %v37, 0
  %72 = vmatprep.subr.mxu0 0.0
  %73 = vmatpush1.msra.mxu0 %v38
  %74 = vmatprep.subr.mxu0 0.0
  %75 = vmatpush1.msra.mxu0 %v39
  %76 = vmatprep.subr.mxu0 0.0
  %77 = vmatpush1.msra.mxu0 0.0
  %78 = vmatprep.subr.mxu0 0.0
  %79 = vmatpush1.msra.mxu0 0.0
  %80 = vmatprep.subr.mxu0 0.0
  %81 = vmatpush1.msra.mxu0 0.0
  %82 = vmatprep.subr.mxu0 0.0
  %83 = vmatpush1.msra.mxu0 0.0
  %84 = vmatprep.subr.mxu0 0.0
  %85 = vmatpush1.msra.mxu0 0.0
  %86 = vmatprep.subr.mxu0 0.0
  %87 = vmatpush1.msra.mxu0 0.0
  %88 = vmatprep.subr.mxu0 0.0
  %89 = vmatpush1.msra.mxu0 0.0
  %90 = vmatprep.subr.mxu0 0.0
  %91 = vmatpush1.msra.mxu0 0.0
  %92 = vmatprep.subr.mxu0 0.0
  %93 = vmatpush1.msra.mxu0 0.0
  %94 = vmatprep.subr.mxu0 0.0
  %95 = vmatpush1.msra.mxu0 0.0
  %96 = vmatprep.subr.mxu0 0.0
  %97 = vmatpush1.msra.mxu0 0.0
  %98 = vmatprep.subr.mxu0 0.0
  %99 = vmatpush1.msra.mxu0 0.0
  %100 = vmatprep.subr.mxu0 0.0
  %101 = vmatpush1.msra.mxu0 0.0
  %102 = vmatprep.subr.mxu0 0.0
  %103 = vmatpush1.msra.mxu0 0.0
  %104 = vmatprep.subr.mxu0 0.0
  %105 = vmatpush1.msra.mxu0 0.0
  %106 = vmatprep.subr.mxu0 0.0
  %107 = vmatpush1.msra.mxu0 0.0
  %108 = vmatprep.subr.mxu0 0.0
  %109 = vmatpush1.msra.mxu0 0.0
  %110 = vmatprep.subr.mxu0 0.0
  %111 = vmatpush1.msra.mxu0 0.0
  %112 = vmatprep.subr.mxu0 0.0
  %113 = vmatpush1.msra.mxu0 0.0
  %114 = vmatprep.subr.mxu0 0.0
  %115 = vmatpush1.msra.mxu0 0.0
  %116 = vmatprep.subr.mxu0 0.0
  %117 = vmatpush1.msra.mxu0 0.0
  %118 = vmatprep.subr.mxu0 0.0
  %119 = vmatpush1.msra.mxu0 0.0
  %120 = vmatprep.subr.mxu0 0.0
  %121 = vmatpush1.msra.mxu0 0.0
  %122 = vmatprep.subr.mxu0 0.0
  %123 = vmatpush1.msra.mxu0 0.0
  %124 = vmatprep.subr.mxu0 0.0
  %125 = vmatpush1.msra.mxu0 0.0
  %126 = vmatprep.subr.mxu0 0.0
  %127 = vmatpush1.msra.mxu0 0.0
  %128 = vmatprep.subr.mxu0 0.0
  %129 = vmatpush1.msra.mxu0 0.0
  %130 = vmatprep.subr.mxu0 0.0
  %131 = vmatpush1.msra.mxu0 0.0
  %132 = vmatprep.subr.mxu0 0.0
  %133 = vmatpush1.msra.mxu0 0.0
  %134 = vmatprep.subr.mxu0 0.0
  %135 = vmatpush1.msra.mxu0 0.0
  %136 = vmatprep.mubr.f32.mxu0 0.0
  %137 = vmatmul.mubr.f32.gmra.mrb[0].mxu0 %v49
  %v138 = vpop.f32.mrb[0].mxu0
  %v139 = vadd.f32 %v45, %v138
  %v140 = vpop.f32.mrb[0].mxu0
  %141 = vmatprep.mubr.f32.mxu0 0.0
  %142 = vmatmul.mubr.f32.gmra.mrb[0].mxu0 %v52
  %v143 = vpop.f32.mrb[0].mxu0
  %v144 = vadd.f32 %v45, %v143
  %v145 = vpop.f32.mrb[0].mxu0
  %146 = vmatprep.mubr.f32.mxu0 0.0
  %147 = vmatmul.mubr.f32.gmra.mrb[0].mxu0 %v55
  %v148 = vpop.f32.mrb[0].mxu0
  %v149 = vadd.f32 %v45, %v148
  %v150 = vpop.f32.mrb[0].mxu0
  %151 = vmatprep.mubr.f32.mxu0 0.0
  %152 = vmatmul.mubr.f32.gmra.mrb[0].mxu0 %v58
  %v153 = vpop.f32.mrb[0].mxu0
  %v154 = vadd.f32 %v45, %v153
  %v155 = vpop.f32.mrb[0].mxu0
  %156 = vmatprep.mubr.f32.mxu0 0.0
  %157 = vmatmul.mubr.f32.gmra.mrb[0].mxu0 %v61
  %v158 = vpop.f32.mrb[0].mxu0
  %v159 = vadd.f32 %v45, %v158
  %v160 = vpop.f32.mrb[0].mxu0
  %161 = vmatprep.mubr.f32.mxu0 0.0
  %162 = vmatmul.mubr.f32.gmra.mrb[0].mxu0 %v64
  %v163 = vpop.f32.mrb[0].mxu0
  %v164 = vadd.f32 %v45, %v163
  %v165 = vpop.f32.mrb[0].mxu0
  %166 = vmatprep.mubr.f32.mxu0 0.0
  %167 = vmatmul.mubr.f32.gmra.mrb[0].mxu0 %v67
  %v168 = vpop.f32.mrb[0].mxu0
  %v169 = vadd.f32 %v45, %v168
  %v170 = vpop.f32.mrb[0].mxu0
  %171 = vmatprep.mubr.f32.mxu0 0.0
  %172 = vmatmul.mubr.f32.gmra.mrb[0].mxu0 %v70
  %v173 = vpop.f32.mrb[0].mxu0
  %v174 = vadd.f32 %v45, %v173
  %v175 = vpop.f32.mrb[0].mxu0
  %176 = vdwg.mxu0
  %177 = vst [vmem:[#allocation4] sm:$0xff] %v139
  %178 = vst [vmem:[#allocation4 + $0x8] sm:$0xff] %v144
  %179 = vst [vmem:[#allocation4 + $0x10] sm:$0xff] %v149
  %180 = vst [vmem:[#allocation4 + $0x18] sm:$0xff] %v154
  %181 = vst [vmem:[#allocation4 + $0x20] sm:$0xff] %v159
  %182 = vst [vmem:[#allocation4 + $0x28] sm:$0xff] %v164
  %183 = vst [vmem:[#allocation4 + $0x30] sm:$0xff] %v169
  %184 = vst [vmem:[#allocation4 + $0x38] sm:$0xff] %v174
  %v185 = vld [vmem:[%s2] sm:$0xff]
  %v186 = vld [vmem:[%s2 + $0x8] sm:$0xff]
  %v187 = vld [vmem:[%s2 + $0x10] sm:$0xff]
  %v188 = vld [vmem:[%s2 + $0x18] sm:$0xff]
  %v189 = vld [vmem:[#allocation2] sm:$0xff]
  %v190 = vld [vmem:[#allocation3] sm:$0xff]
  %v191 = vld [vmem:[#allocation4] sm:$0xff]
  %vm192 = vcmask 261120
  %v194 = vsel %vm192, %v189, 0
  %196 = vmatprep.subr.mxu0 0.0
  %197 = vmatpush1.msra.mxu0 %v185
  %198 = vmatprep.subr.mxu0 0.0
  %199 = vmatpush1.msra.mxu0 %v186
  %200 = vmatprep.subr.mxu0 0.0
  %201 = vmatpush1.msra.mxu0 %v187
  %202 = vmatprep.subr.mxu0 0.0
  %203 = vmatpush1.msra.mxu0 %v188
  %204 = vmatprep.subr.mxu0 0.0
  %205 = vmatpush1.msra.mxu0 0.0
  %206 = vmatprep.subr.mxu0 0.0
  %207 = vmatpush1.msra.mxu0 0.0
  %208 = vmatprep.subr.mxu0 0.0
  %209 = vmatpush1.msra.mxu0 0.0
  %210 = vmatprep.subr.mxu0 0.0
  %211 = vmatpush1.msra.mxu0 0.0
  %212 = vmatprep.subr.mxu0 0.0
  %213 = vmatpush1.msra.mxu0 0.0
  %214 = vmatprep.subr.mxu0 0.0
  %215 = vmatpush1.msra.mxu0 0.0
  %216 = vmatprep.subr.mxu0 0.0
  %217 = vmatpush1.msra.mxu0 0.0
  %218 = vmatprep.subr.mxu0 0.0
  %219 = vmatpush1.msra.mxu0 0.0
  %220 = vmatprep.subr.mxu0 0.0
  %221 = vmatpush1.msra.mxu0 0.0
  %222 = vmatprep.subr.mxu0 0.0
  %223 = vmatpush1.msra.mxu0 0.0
  %224 = vmatprep.subr.mxu0 0.0
  %225 = vmatpush1.msra.mxu0 0.0
  %226 = vmatprep.subr.mxu0 0.0
  %227 = vmatpush1.msra.mxu0 0.0
  %228 = vmatprep.subr.mxu0 0.0
  %229 = vmatpush1.msra.mxu0 0.0
  %230 = vmatprep.subr.mxu0 0.0
  %231 = vmatpush1.msra.mxu0 0.0
  %232 = vmatprep.subr.mxu0 0.0
  %233 = vmatpush1.msra.mxu0 0.0
  %234 = vmatprep.subr.mxu0 0.0
  %235 = vmatpush1.msra.mxu0 0.0
  %236 = vmatprep.subr.mxu0 0.0
  %237 = vmatpush1.msra.mxu0 0.0
  %238 = vmatprep.subr.mxu0 0.0
  %239 = vmatpush1.msra.mxu0 0.0
  %240 = vmatprep.subr.mxu0 0.0
  %241 = vmatpush1.msra.mxu0 0.0
  %242 = vmatprep.subr.mxu0 0.0
  %243 = vmatpush1.msra.mxu0 0.0
  %244 = vmatprep.subr.mxu0 0.0
  %245 = vmatpush1.msra.mxu0 0.0
  %246 = vmatprep.subr.mxu0 0.0
  %247 = vmatpush1.msra.mxu0 0.0
  %248 = vmatprep.subr.mxu0 0.0
  %249 = vmatpush1.msra.mxu0 0.0
  %250 = vmatprep.subr.mxu0 0.0
  %251 = vmatpush1.msra.mxu0 0.0
  %252 = vmatprep.subr.mxu0 0.0
  %253 = vmatpush1.msra.mxu0 0.0
  %254 = vmatprep.subr.mxu0 0.0
  %255 = vmatpush1.msra.mxu0 0.0
  %256 = vmatprep.subr.mxu0 0.0
  %257 = vmatpush1.msra.mxu0 0.0
  %258 = vmatprep.subr.mxu0 0.0
  %259 = vmatpush1.msra.mxu0 0.0
  %260 = vmatprep.mubr.f32.mxu0 0.0
  %261 = vmatmul.mubr.f32.gmra.mrb[0].mxu0 %v194
  %v262 = vpop.f32.mrb[0].mxu0
  %v263 = vadd.f32 0.0, %v262
  %v264 = vpop.f32.mrb[0].mxu0
  %265 = vdwg.mxu0
  %v266 = vadd.f32 %v191, %v263
  %v267 = vxor.u32 %v266, 2147483648
  %v268 = vmul.f32 %v267, 1.442695
  %v269 = vpow.pop %v268
  %v270 = vadd.f32 %v269, 1.0
  %v271 = vrcp.pop %v270
  %v272 = vmul.f32 1.0, %v271
  %v273 = vtanh.pop %v266
  %275 = vrot.lane.b32.xlu0 %v190, 32
  %v276 = vpop.permute.xlu0 %275
  %v278 = vmul.f32 %v272, %v276
  %280 = vrot.lane.b32.xlu0 %v273, 64
  %v281 = vpop.permute.xlu0 %280
  %v283 = vmul.f32 %v272, %v281
  %285 = vrot.lane.b32.xlu0 %v283, 32
  %v286 = vpop.permute.xlu0 %285
  %v288 = vadd.f32 %v278, %v286
  %v289 = vtanh.pop %v288
  %291 = vrot.lane.b32.xlu0 %v289, 64
  %v292 = vpop.permute.xlu0 %291
  %v294 = vmul.f32 %v272, %v292
  %296 = vrot.lane.b32.xlu0 %v294, 32
  %v297 = vpop.permute.xlu0 %296
  %299 = vst.msk [vmem:[#allocation5] sm:$0xff] %vm192, %v297
  %s300 = scalar_lea.vmem [#allocation4], 8
  %v301 = vld [vmem:[%s300] sm:$0xff]
  %v302 = vsel %vm192, %v297, 0
  %304 = vmatprep.subr.mxu0 0.0
  %305 = vmatpush1.msra.mxu0 %v185
  %306 = vmatprep.subr.mxu0 0.0
  %307 = vmatpush1.msra.mxu0 %v186
  %308 = vmatprep.subr.mxu0 0.0
  %309 = vmatpush1.msra.mxu0 %v187
  %310 = vmatprep.subr.mxu0 0.0
  %311 = vmatpush1.msra.mxu0 %v188
  %312 = vmatprep.subr.mxu0 0.0
  %313 = vmatpush1.msra.mxu0 0.0
  %314 = vmatprep.subr.mxu0 0.0
  %315 = vmatpush1.msra.mxu0 0.0
  %316 = vmatprep.subr.mxu0 0.0
  %317 = vmatpush1.msra.mxu0 0.0
  %318 = vmatprep.subr.mxu0 0.0
  %319 = vmatpush1.msra.mxu0 0.0
  %320 = vmatprep.subr.mxu0 0.0
  %321 = vmatpush1.msra.mxu0 0.0
  %322 = vmatprep.subr.mxu0 0.0
  %323 = vmatpush1.msra.mxu0 0.0
  %324 = vmatprep.subr.mxu0 0.0
  %325 = vmatpush1.msra.mxu0 0.0
  %326 = vmatprep.subr.mxu0 0.0
  %327 = vmatpush1.msra.mxu0 0.0
  %328 = vmatprep.subr.mxu0 0.0
  %329 = vmatpush1.msra.mxu0 0.0
  %330 = vmatprep.subr.mxu0 0.0
  %331 = vmatpush1.msra.mxu0 0.0
  %332 = vmatprep.subr.mxu0 0.0
  %333 = vmatpush1.msra.mxu0 0.0
  %334 = vmatprep.subr.mxu0 0.0
  %335 = vmatpush1.msra.mxu0 0.0
  %336 = vmatprep.subr.mxu0 0.0
  %337 = vmatpush1.msra.mxu0 0.0
  %338 = vmatprep.subr.mxu0 0.0
  %339 = vmatpush1.msra.mxu0 0.0
  %340 = vmatprep.subr.mxu0 0.0
  %341 = vmatpush1.msra.mxu0 0.0
  %342 = vmatprep.subr.mxu0 0.0
  %343 = vmatpush1.msra.mxu0 0.0
  %344 = vmatprep.subr.mxu0 0.0
  %345 = vmatpush1.msra.mxu0 0.0
  %346 = vmatprep.subr.mxu0 0.0
  %347 = vmatpush1.msra.mxu0 0.0
  %348 = vmatprep.subr.mxu0 0.0
  %349 = vmatpush1.msra.mxu0 0.0
  %350 = vmatprep.subr.mxu0 0.0
  %351 = vmatpush1.msra.mxu0 0.0
  %352 = vmatprep.subr.mxu0 0.0
  %353 = vmatpush1.msra.mxu0 0.0
  %354 = vmatprep.subr.mxu0 0.0
  %355 = vmatpush1.msra.mxu0 0.0
  %356 = vmatprep.subr.mxu0 0.0
  %357 = vmatpush1.msra.mxu0 0.0
  %358 = vmatprep.subr.mxu0 0.0
  %359 = vmatpush1.msra.mxu0 0.0
  %360 = vmatprep.subr.mxu0 0.0
  %361 = vmatpush1.msra.mxu0 0.0
  %362 = vmatprep.subr.mxu0 0.0
  %363 = vmatpush1.msra.mxu0 0.0
  %364 = vmatprep.subr.mxu0 0.0
  %365 = vmatpush1.msra.mxu0 0.0
  %366 = vmatprep.subr.mxu0 0.0
  %367 = vmatpush1.msra.mxu0 0.0
  %368 = vmatprep.mubr.f32.mxu0 0.0
  %369 = vmatmul.mubr.f32.gmra.mrb[0].mxu0 %v302
  %v370 = vpop.f32.mrb[0].mxu0
  %v371 = vadd.f32 0.0, %v370
  %v372 = vpop.f32.mrb[0].mxu0
  %373 = vdwg.mxu0
  %v374 = vadd.f32 %v301, %v371
  %v375 = vxor.u32 %v374, 2147483648
  %v376 = vmul.f32 %v375, 1.442695
  %v377 = vpow.pop %v376
  %v378 = vadd.f32 %v377, 1.0
  %v379 = vrcp.pop %v378
  %v380 = vmul.f32 1.0, %v379
  %v381 = vtanh.pop %v374
  %v382 = vmul.f32 %v380, %v288
  %384 = vrot.lane.b32.xlu0 %v381, 64
  %v385 = vpop.permute.xlu0 %384
  %v387 = vmul.f32 %v380, %v385
  %389 = vrot.lane.b32.xlu0 %v387, 32
  %v390 = vpop.permute.xlu0 %389
  %v392 = vadd.f32 %v382, %v390
  %v393 = vtanh.pop %v392
  %395 = vrot.lane.b32.xlu0 %v393, 64
  %v396 = vpop.permute.xlu0 %395
  %v398 = vmul.f32 %v380, %v396
  %400 = vrot.lane.b32.xlu0 %v398, 32
  %v401 = vpop.permute.xlu0 %400
  %s403 = scalar_lea.vmem [#allocation5], 8
  %404 = vst.msk [vmem:[%s403] sm:$0xff] %vm192, %v401
  %s405 = scalar_lea.vmem [#allocation4], 16
  %v406 = vld [vmem:[%s405] sm:$0xff]
  %v407 = vsel %vm192, %v401, 0
  %409 = vmatprep.subr.mxu0 0.0
  %410 = vmatpush1.msra.mxu0 %v185
  %411 = vmatprep.subr.mxu0 0.0
  %412 = vmatpush1.msra.mxu0 %v186
  %413 = vmatprep.subr.mxu0 0.0
  %414 = vmatpush1.msra.mxu0 %v187
  %415 = vmatprep.subr.mxu0 0.0
  %416 = vmatpush1.msra.mxu0 %v188
  %417 = vmatprep.subr.mxu0 0.0
  %418 = vmatpush1.msra.mxu0 0.0
  %419 = vmatprep.subr.mxu0 0.0
  %420 = vmatpush1.msra.mxu0 0.0
  %421 = vmatprep.subr.mxu0 0.0
  %422 = vmatpush1.msra.mxu0 0.0
  %423 = vmatprep.subr.mxu0 0.0
  %424 = vmatpush1.msra.mxu0 0.0
  %425 = vmatprep.subr.mxu0 0.0
  %426 = vmatpush1.msra.mxu0 0.0
  %427 = vmatprep.subr.mxu0 0.0
  %428 = vmatpush1.msra.mxu0 0.0
  %429 = vmatprep.subr.mxu0 0.0
  %430 = vmatpush1.msra.mxu0 0.0
  %431 = vmatprep.subr.mxu0 0.0
  %432 = vmatpush1.msra.mxu0 0.0
  %433 = vmatprep.subr.mxu0 0.0
  %434 = vmatpush1.msra.mxu0 0.0
  %435 = vmatprep.subr.mxu0 0.0
  %436 = vmatpush1.msra.mxu0 0.0
  %437 = vmatprep.subr.mxu0 0.0
  %438 = vmatpush1.msra.mxu0 0.0
  %439 = vmatprep.subr.mxu0 0.0
  %440 = vmatpush1.msra.mxu0 0.0
  %441 = vmatprep.subr.mxu0 0.0
  %442 = vmatpush1.msra.mxu0 0.0
  %443 = vmatprep.subr.mxu0 0.0
  %444 = vmatpush1.msra.mxu0 0.0
  %445 = vmatprep.subr.mxu0 0.0
  %446 = vmatpush1.msra.mxu0 0.0
  %447 = vmatprep.subr.mxu0 0.0
  %448 = vmatpush1.msra.mxu0 0.0
  %449 = vmatprep.subr.mxu0 0.0
  %450 = vmatpush1.msra.mxu0 0.0
  %451 = vmatprep.subr.mxu0 0.0
  %452 = vmatpush1.msra.mxu0 0.0
  %453 = vmatprep.subr.mxu0 0.0
  %454 = vmatpush1.msra.mxu0 0.0
  %455 = vmatprep.subr.mxu0 0.0
  %456 = vmatpush1.msra.mxu0 0.0
  %457 = vmatprep.subr.mxu0 0.0
  %458 = vmatpush1.msra.mxu0 0.0
  %459 = vmatprep.subr.mxu0 0.0
  %460 = vmatpush1.msra.mxu0 0.0
  %461 = vmatprep.subr.mxu0 0.0
  %462 = vmatpush1.msra.mxu0 0.0
  %463 = vmatprep.subr.mxu0 0.0
  %464 = vmatpush1.msra.mxu0 0.0
  %465 = vmatprep.subr.mxu0 0.0
  %466 = vmatpush1.msra.mxu0 0.0
  %467 = vmatprep.subr.mxu0 0.0
  %468 = vmatpush1.msra.mxu0 0.0
  %469 = vmatprep.subr.mxu0 0.0
  %470 = vmatpush1.msra.mxu0 0.0
  %471 = vmatprep.subr.mxu0 0.0
  %472 = vmatpush1.msra.mxu0 0.0
  %473 = vmatprep.mubr.f32.mxu0 0.0
  %474 = vmatmul.mubr.f32.gmra.mrb[0].mxu0 %v407
  %v475 = vpop.f32.mrb[0].mxu0
  %v476 = vadd.f32 0.0, %v475
  %v477 = vpop.f32.mrb[0].mxu0
  %478 = vdwg.mxu0
  %v479 = vadd.f32 %v406, %v476
  %v480 = vxor.u32 %v479, 2147483648
  %v481 = vmul.f32 %v480, 1.442695
  %v482 = vpow.pop %v481
  %v483 = vadd.f32 %v482, 1.0
  %v484 = vrcp.pop %v483
  %v485 = vmul.f32 1.0, %v484
  %v486 = vtanh.pop %v479
  %v487 = vmul.f32 %v485, %v392
  %489 = vrot.lane.b32.xlu0 %v486, 64
  %v490 = vpop.permute.xlu0 %489
  %v492 = vmul.f32 %v485, %v490
  %494 = vrot.lane.b32.xlu0 %v492, 32
  %v495 = vpop.permute.xlu0 %494
  %v497 = vadd.f32 %v487, %v495
  %v498 = vtanh.pop %v497
  %500 = vrot.lane.b32.xlu0 %v498, 64
  %v501 = vpop.permute.xlu0 %500
  %v503 = vmul.f32 %v485, %v501
  %505 = vrot.lane.b32.xlu0 %v503, 32
  %v506 = vpop.permute.xlu0 %505
  %s508 = scalar_lea.vmem [#allocation5], 16
  %509 = vst.msk [vmem:[%s508] sm:$0xff] %vm192, %v506
  %s510 = scalar_lea.vmem [#allocation4], 24
  %v511 = vld [vmem:[%s510] sm:$0xff]
  %v512 = vsel %vm192, %v506, 0
  %514 = vmatprep.subr.mxu0 0.0
  %515 = vmatpush1.msra.mxu0 %v185
  %516 = vmatprep.subr.mxu0 0.0
  %517 = vmatpush1.msra.mxu0 %v186
  %518 = vmatprep.subr.mxu0 0.0
  %519 = vmatpush1.msra.mxu0 %v187
  %520 = vmatprep.subr.mxu0 0.0
  %521 = vmatpush1.msra.mxu0 %v188
  %522 = vmatprep.subr.mxu0 0.0
  %523 = vmatpush1.msra.mxu0 0.0
  %524 = vmatprep.subr.mxu0 0.0
  %525 = vmatpush1.msra.mxu0 0.0
  %526 = vmatprep.subr.mxu0 0.0
  %527 = vmatpush1.msra.mxu0 0.0
  %528 = vmatprep.subr.mxu0 0.0
  %529 = vmatpush1.msra.mxu0 0.0
  %530 = vmatprep.subr.mxu0 0.0
  %531 = vmatpush1.msra.mxu0 0.0
  %532 = vmatprep.subr.mxu0 0.0
  %533 = vmatpush1.msra.mxu0 0.0
  %534 = vmatprep.subr.mxu0 0.0
  %535 = vmatpush1.msra.mxu0 0.0
  %536 = vmatprep.subr.mxu0 0.0
  %537 = vmatpush1.msra.mxu0 0.0
  %538 = vmatprep.subr.mxu0 0.0
  %539 = vmatpush1.msra.mxu0 0.0
  %540 = vmatprep.subr.mxu0 0.0
  %541 = vmatpush1.msra.mxu0 0.0
  %542 = vmatprep.subr.mxu0 0.0
  %543 = vmatpush1.msra.mxu0 0.0
  %544 = vmatprep.subr.mxu0 0.0
  %545 = vmatpush1.msra.mxu0 0.0
  %546 = vmatprep.subr.mxu0 0.0
  %547 = vmatpush1.msra.mxu0 0.0
  %548 = vmatprep.subr.mxu0 0.0
  %549 = vmatpush1.msra.mxu0 0.0
  %550 = vmatprep.subr.mxu0 0.0
  %551 = vmatpush1.msra.mxu0 0.0
  %552 = vmatprep.subr.mxu0 0.0
  %553 = vmatpush1.msra.mxu0 0.0
  %554 = vmatprep.subr.mxu0 0.0
  %555 = vmatpush1.msra.mxu0 0.0
  %556 = vmatprep.subr.mxu0 0.0
  %557 = vmatpush1.msra.mxu0 0.0
  %558 = vmatprep.subr.mxu0 0.0
  %559 = vmatpush1.msra.mxu0 0.0
  %560 = vmatprep.subr.mxu0 0.0
  %561 = vmatpush1.msra.mxu0 0.0
  %562 = vmatprep.subr.mxu0 0.0
  %563 = vmatpush1.msra.mxu0 0.0
  %564 = vmatprep.subr.mxu0 0.0
  %565 = vmatpush1.msra.mxu0 0.0
  %566 = vmatprep.subr.mxu0 0.0
  %567 = vmatpush1.msra.mxu0 0.0
  %568 = vmatprep.subr.mxu0 0.0
  %569 = vmatpush1.msra.mxu0 0.0
  %570 = vmatprep.subr.mxu0 0.0
  %571 = vmatpush1.msra.mxu0 0.0
  %572 = vmatprep.subr.mxu0 0.0
  %573 = vmatpush1.msra.mxu0 0.0
  %574 = vmatprep.subr.mxu0 0.0
  %575 = vmatpush1.msra.mxu0 0.0
  %576 = vmatprep.subr.mxu0 0.0
  %577 = vmatpush1.msra.mxu0 0.0
  %578 = vmatprep.mubr.f32.mxu0 0.0
  %579 = vmatmul.mubr.f32.gmra.mrb[0].mxu0 %v512
  %v580 = vpop.f32.mrb[0].mxu0
  %v581 = vadd.f32 0.0, %v580
  %v582 = vpop.f32.mrb[0].mxu0
  %583 = vdwg.mxu0
  %v584 = vadd.f32 %v511, %v581
  %v585 = vxor.u32 %v584, 2147483648
  %v586 = vmul.f32 %v585, 1.442695
  %v587 = vpow.pop %v586
  %v588 = vadd.f32 %v587, 1.0
  %v589 = vrcp.pop %v588
  %v590 = vmul.f32 1.0, %v589
  %v591 = vtanh.pop %v584
  %v592 = vmul.f32 %v590, %v497
  %594 = vrot.lane.b32.xlu0 %v591, 64
  %v595 = vpop.permute.xlu0 %594
  %v597 = vmul.f32 %v590, %v595
  %599 = vrot.lane.b32.xlu0 %v597, 32
  %v600 = vpop.permute.xlu0 %599
  %v602 = vadd.f32 %v592, %v600
  %v603 = vtanh.pop %v602
  %605 = vrot.lane.b32.xlu0 %v603, 64
  %v606 = vpop.permute.xlu0 %605
  %v608 = vmul.f32 %v590, %v606
  %610 = vrot.lane.b32.xlu0 %v608, 32
  %v611 = vpop.permute.xlu0 %610
  %s613 = scalar_lea.vmem [#allocation5], 24
  %614 = vst.msk [vmem:[%s613] sm:$0xff] %vm192, %v611
  %s615 = scalar_lea.vmem [#allocation4], 32
  %v616 = vld [vmem:[%s615] sm:$0xff]
  %v617 = vsel %vm192, %v611, 0
  %619 = vmatprep.subr.mxu0 0.0
  %620 = vmatpush1.msra.mxu0 %v185
  %621 = vmatprep.subr.mxu0 0.0
  %622 = vmatpush1.msra.mxu0 %v186
  %623 = vmatprep.subr.mxu0 0.0
  %624 = vmatpush1.msra.mxu0 %v187
  %625 = vmatprep.subr.mxu0 0.0
  %626 = vmatpush1.msra.mxu0 %v188
  %627 = vmatprep.subr.mxu0 0.0
  %628 = vmatpush1.msra.mxu0 0.0
  %629 = vmatprep.subr.mxu0 0.0
  %630 = vmatpush1.msra.mxu0 0.0
  %631 = vmatprep.subr.mxu0 0.0
  %632 = vmatpush1.msra.mxu0 0.0
  %633 = vmatprep.subr.mxu0 0.0
  %634 = vmatpush1.msra.mxu0 0.0
  %635 = vmatprep.subr.mxu0 0.0
  %636 = vmatpush1.msra.mxu0 0.0
  %637 = vmatprep.subr.mxu0 0.0
  %638 = vmatpush1.msra.mxu0 0.0
  %639 = vmatprep.subr.mxu0 0.0
  %640 = vmatpush1.msra.mxu0 0.0
  %641 = vmatprep.subr.mxu0 0.0
  %642 = vmatpush1.msra.mxu0 0.0
  %643 = vmatprep.subr.mxu0 0.0
  %644 = vmatpush1.msra.mxu0 0.0
  %645 = vmatprep.subr.mxu0 0.0
  %646 = vmatpush1.msra.mxu0 0.0
  %647 = vmatprep.subr.mxu0 0.0
  %648 = vmatpush1.msra.mxu0 0.0
  %649 = vmatprep.subr.mxu0 0.0
  %650 = vmatpush1.msra.mxu0 0.0
  %651 = vmatprep.subr.mxu0 0.0
  %652 = vmatpush1.msra.mxu0 0.0
  %653 = vmatprep.subr.mxu0 0.0
  %654 = vmatpush1.msra.mxu0 0.0
  %655 = vmatprep.subr.mxu0 0.0
  %656 = vmatpush1.msra.mxu0 0.0
  %657 = vmatprep.subr.mxu0 0.0
  %658 = vmatpush1.msra.mxu0 0.0
  %659 = vmatprep.subr.mxu0 0.0
  %660 = vmatpush1.msra.mxu0 0.0
  %661 = vmatprep.subr.mxu0 0.0
  %662 = vmatpush1.msra.mxu0 0.0
  %663 = vmatprep.subr.mxu0 0.0
  %664 = vmatpush1.msra.mxu0 0.0
  %665 = vmatprep.subr.mxu0 0.0
  %666 = vmatpush1.msra.mxu0 0.0
  %667 = vmatprep.subr.mxu0 0.0
  %668 = vmatpush1.msra.mxu0 0.0
  %669 = vmatprep.subr.mxu0 0.0
  %670 = vmatpush1.msra.mxu0 0.0
  %671 = vmatprep.subr.mxu0 0.0
  %672 = vmatpush1.msra.mxu0 0.0
  %673 = vmatprep.subr.mxu0 0.0
  %674 = vmatpush1.msra.mxu0 0.0
  %675 = vmatprep.subr.mxu0 0.0
  %676 = vmatpush1.msra.mxu0 0.0
  %677 = vmatprep.subr.mxu0 0.0
  %678 = vmatpush1.msra.mxu0 0.0
  %679 = vmatprep.subr.mxu0 0.0
  %680 = vmatpush1.msra.mxu0 0.0
  %681 = vmatprep.subr.mxu0 0.0
  %682 = vmatpush1.msra.mxu0 0.0
  %683 = vmatprep.mubr.f32.mxu0 0.0
  %684 = vmatmul.mubr.f32.gmra.mrb[0].mxu0 %v617
  %v685 = vpop.f32.mrb[0].mxu0
  %v686 = vadd.f32 0.0, %v685
  %v687 = vpop.f32.mrb[0].mxu0
  %688 = vdwg.mxu0
  %v689 = vadd.f32 %v616, %v686
  %v690 = vxor.u32 %v689, 2147483648
  %v691 = vmul.f32 %v690, 1.442695
  %v692 = vpow.pop %v691
  %v693 = vadd.f32 %v692, 1.0
  %v694 = vrcp.pop %v693
  %v695 = vmul.f32 1.0, %v694
  %v696 = vtanh.pop %v689
  %v697 = vmul.f32 %v695, %v602
  %699 = vrot.lane.b32.xlu0 %v696, 64
  %v700 = vpop.permute.xlu0 %699
  %v702 = vmul.f32 %v695, %v700
  %704 = vrot.lane.b32.xlu0 %v702, 32
  %v705 = vpop.permute.xlu0 %704
  %v707 = vadd.f32 %v697, %v705
  %v708 = vtanh.pop %v707
  %710 = vrot.lane.b32.xlu0 %v708, 64
  %v711 = vpop.permute.xlu0 %710
  %v713 = vmul.f32 %v695, %v711
  %715 = vrot.lane.b32.xlu0 %v713, 32
  %v716 = vpop.permute.xlu0 %715
  %s718 = scalar_lea.vmem [#allocation5], 32
  %719 = vst.msk [vmem:[%s718] sm:$0xff] %vm192, %v716
  %s720 = scalar_lea.vmem [#allocation4], 40
  %v721 = vld [vmem:[%s720] sm:$0xff]
  %v722 = vsel %vm192, %v716, 0
  %724 = vmatprep.subr.mxu0 0.0
  %725 = vmatpush1.msra.mxu0 %v185
  %726 = vmatprep.subr.mxu0 0.0
  %727 = vmatpush1.msra.mxu0 %v186
  %728 = vmatprep.subr.mxu0 0.0
  %729 = vmatpush1.msra.mxu0 %v187
  %730 = vmatprep.subr.mxu0 0.0
  %731 = vmatpush1.msra.mxu0 %v188
  %732 = vmatprep.subr.mxu0 0.0
  %733 = vmatpush1.msra.mxu0 0.0
  %734 = vmatprep.subr.mxu0 0.0
  %735 = vmatpush1.msra.mxu0 0.0
  %736 = vmatprep.subr.mxu0 0.0
  %737 = vmatpush1.msra.mxu0 0.0
  %738 = vmatprep.subr.mxu0 0.0
  %739 = vmatpush1.msra.mxu0 0.0
  %740 = vmatprep.subr.mxu0 0.0
  %741 = vmatpush1.msra.mxu0 0.0
  %742 = vmatprep.subr.mxu0 0.0
  %743 = vmatpush1.msra.mxu0 0.0
  %744 = vmatprep.subr.mxu0 0.0
  %745 = vmatpush1.msra.mxu0 0.0
  %746 = vmatprep.subr.mxu0 0.0
  %747 = vmatpush1.msra.mxu0 0.0
  %748 = vmatprep.subr.mxu0 0.0
  %749 = vmatpush1.msra.mxu0 0.0
  %750 = vmatprep.subr.mxu0 0.0
  %751 = vmatpush1.msra.mxu0 0.0
  %752 = vmatprep.subr.mxu0 0.0
  %753 = vmatpush1.msra.mxu0 0.0
  %754 = vmatprep.subr.mxu0 0.0
  %755 = vmatpush1.msra.mxu0 0.0
  %756 = vmatprep.subr.mxu0 0.0
  %757 = vmatpush1.msra.mxu0 0.0
  %758 = vmatprep.subr.mxu0 0.0
  %759 = vmatpush1.msra.mxu0 0.0
  %760 = vmatprep.subr.mxu0 0.0
  %761 = vmatpush1.msra.mxu0 0.0
  %762 = vmatprep.subr.mxu0 0.0
  %763 = vmatpush1.msra.mxu0 0.0
  %764 = vmatprep.subr.mxu0 0.0
  %765 = vmatpush1.msra.mxu0 0.0
  %766 = vmatprep.subr.mxu0 0.0
  %767 = vmatpush1.msra.mxu0 0.0
  %768 = vmatprep.subr.mxu0 0.0
  %769 = vmatpush1.msra.mxu0 0.0
  %770 = vmatprep.subr.mxu0 0.0
  %771 = vmatpush1.msra.mxu0 0.0
  %772 = vmatprep.subr.mxu0 0.0
  %773 = vmatpush1.msra.mxu0 0.0
  %774 = vmatprep.subr.mxu0 0.0
  %775 = vmatpush1.msra.mxu0 0.0
  %776 = vmatprep.subr.mxu0 0.0
  %777 = vmatpush1.msra.mxu0 0.0
  %778 = vmatprep.subr.mxu0 0.0
  %779 = vmatpush1.msra.mxu0 0.0
  %780 = vmatprep.subr.mxu0 0.0
  %781 = vmatpush1.msra.mxu0 0.0
  %782 = vmatprep.subr.mxu0 0.0
  %783 = vmatpush1.msra.mxu0 0.0
  %784 = vmatprep.subr.mxu0 0.0
  %785 = vmatpush1.msra.mxu0 0.0
  %786 = vmatprep.subr.mxu0 0.0
  %787 = vmatpush1.msra.mxu0 0.0
  %788 = vmatprep.mubr.f32.mxu0 0.0
  %789 = vmatmul.mubr.f32.gmra.mrb[0].mxu0 %v722
  %v790 = vpop.f32.mrb[0].mxu0
  %v791 = vadd.f32 0.0, %v790
  %v792 = vpop.f32.mrb[0].mxu0
  %793 = vdwg.mxu0
  %v794 = vadd.f32 %v721, %v791
  %v795 = vxor.u32 %v794, 2147483648
  %v796 = vmul.f32 %v795, 1.442695
  %v797 = vpow.pop %v796
  %v798 = vadd.f32 %v797, 1.0
  %v799 = vrcp.pop %v798
  %v800 = vmul.f32 1.0, %v799
  %v801 = vtanh.pop %v794
  %v802 = vmul.f32 %v800, %v707
  %804 = vrot.lane.b32.xlu0 %v801, 64
  %v805 = vpop.permute.xlu0 %804
  %v807 = vmul.f32 %v800, %v805
  %809 = vrot.lane.b32.xlu0 %v807, 32
  %v810 = vpop.permute.xlu0 %809
  %v812 = vadd.f32 %v802, %v810
  %v813 = vtanh.pop %v812
  %815 = vrot.lane.b32.xlu0 %v813, 64
  %v816 = vpop.permute.xlu0 %815
  %v818 = vmul.f32 %v800, %v816
  %820 = vrot.lane.b32.xlu0 %v818, 32
  %v821 = vpop.permute.xlu0 %820
  %s823 = scalar_lea.vmem [#allocation5], 40
  %824 = vst.msk [vmem:[%s823] sm:$0xff] %vm192, %v821
  %s825 = scalar_lea.vmem [#allocation4], 48
  %v826 = vld [vmem:[%s825] sm:$0xff]
  %v827 = vsel %vm192, %v821, 0
  %829 = vmatprep.subr.mxu0 0.0
  %830 = vmatpush1.msra.mxu0 %v185
  %831 = vmatprep.subr.mxu0 0.0
  %832 = vmatpush1.msra.mxu0 %v186
  %833 = vmatprep.subr.mxu0 0.0
  %834 = vmatpush1.msra.mxu0 %v187
  %835 = vmatprep.subr.mxu0 0.0
  %836 = vmatpush1.msra.mxu0 %v188
  %837 = vmatprep.subr.mxu0 0.0
  %838 = vmatpush1.msra.mxu0 0.0
  %839 = vmatprep.subr.mxu0 0.0
  %840 = vmatpush1.msra.mxu0 0.0
  %841 = vmatprep.subr.mxu0 0.0
  %842 = vmatpush1.msra.mxu0 0.0
  %843 = vmatprep.subr.mxu0 0.0
  %844 = vmatpush1.msra.mxu0 0.0
  %845 = vmatprep.subr.mxu0 0.0
  %846 = vmatpush1.msra.mxu0 0.0
  %847 = vmatprep.subr.mxu0 0.0
  %848 = vmatpush1.msra.mxu0 0.0
  %849 = vmatprep.subr.mxu0 0.0
  %850 = vmatpush1.msra.mxu0 0.0
  %851 = vmatprep.subr.mxu0 0.0
  %852 = vmatpush1.msra.mxu0 0.0
  %853 = vmatprep.subr.mxu0 0.0
  %854 = vmatpush1.msra.mxu0 0.0
  %855 = vmatprep.subr.mxu0 0.0
  %856 = vmatpush1.msra.mxu0 0.0
  %857 = vmatprep.subr.mxu0 0.0
  %858 = vmatpush1.msra.mxu0 0.0
  %859 = vmatprep.subr.mxu0 0.0
  %860 = vmatpush1.msra.mxu0 0.0
  %861 = vmatprep.subr.mxu0 0.0
  %862 = vmatpush1.msra.mxu0 0.0
  %863 = vmatprep.subr.mxu0 0.0
  %864 = vmatpush1.msra.mxu0 0.0
  %865 = vmatprep.subr.mxu0 0.0
  %866 = vmatpush1.msra.mxu0 0.0
  %867 = vmatprep.subr.mxu0 0.0
  %868 = vmatpush1.msra.mxu0 0.0
  %869 = vmatprep.subr.mxu0 0.0
  %870 = vmatpush1.msra.mxu0 0.0
  %871 = vmatprep.subr.mxu0 0.0
  %872 = vmatpush1.msra.mxu0 0.0
  %873 = vmatprep.subr.mxu0 0.0
  %874 = vmatpush1.msra.mxu0 0.0
  %875 = vmatprep.subr.mxu0 0.0
  %876 = vmatpush1.msra.mxu0 0.0
  %877 = vmatprep.subr.mxu0 0.0
  %878 = vmatpush1.msra.mxu0 0.0
  %879 = vmatprep.subr.mxu0 0.0
  %880 = vmatpush1.msra.mxu0 0.0
  %881 = vmatprep.subr.mxu0 0.0
  %882 = vmatpush1.msra.mxu0 0.0
  %883 = vmatprep.subr.mxu0 0.0
  %884 = vmatpush1.msra.mxu0 0.0
  %885 = vmatprep.subr.mxu0 0.0
  %886 = vmatpush1.msra.mxu0 0.0
  %887 = vmatprep.subr.mxu0 0.0
  %888 = vmatpush1.msra.mxu0 0.0
  %889 = vmatprep.subr.mxu0 0.0
  %890 = vmatpush1.msra.mxu0 0.0
  %891 = vmatprep.subr.mxu0 0.0
  %892 = vmatpush1.msra.mxu0 0.0
  %893 = vmatprep.mubr.f32.mxu0 0.0
  %894 = vmatmul.mubr.f32.gmra.mrb[0].mxu0 %v827
  %v895 = vpop.f32.mrb[0].mxu0
  %v896 = vadd.f32 0.0, %v895
  %v897 = vpop.f32.mrb[0].mxu0
  %898 = vdwg.mxu0
  %v899 = vadd.f32 %v826, %v896
  %v900 = vxor.u32 %v899, 2147483648
  %v901 = vmul.f32 %v900, 1.442695
  %v902 = vpow.pop %v901
  %v903 = vadd.f32 %v902, 1.0
  %v904 = vrcp.pop %v903
  %v905 = vmul.f32 1.0, %v904
  %v906 = vtanh.pop %v899
  %v907 = vmul.f32 %v905, %v812
  %909 = vrot.lane.b32.xlu0 %v906, 64
  %v910 = vpop.permute.xlu0 %909
  %v912 = vmul.f32 %v905, %v910
  %914 = vrot.lane.b32.xlu0 %v912, 32
  %v915 = vpop.permute.xlu0 %914
  %v917 = vadd.f32 %v907, %v915
  %v918 = vtanh.pop %v917
  %920 = vrot.lane.b32.xlu0 %v918, 64
  %v921 = vpop.permute.xlu0 %920
  %v923 = vmul.f32 %v905, %v921
  %925 = vrot.lane.b32.xlu0 %v923, 32
  %v926 = vpop.permute.xlu0 %925
  %s928 = scalar_lea.vmem [#allocation5], 48
  %929 = vst.msk [vmem:[%s928] sm:$0xff] %vm192, %v926
  %s930 = scalar_lea.vmem [#allocation4], 56
  %v931 = vld [vmem:[%s930] sm:$0xff]
  %v932 = vsel %vm192, %v926, 0
  %934 = vmatprep.subr.mxu0 0.0
  %935 = vmatpush1.msra.mxu0 %v185
  %936 = vmatprep.subr.mxu0 0.0
  %937 = vmatpush1.msra.mxu0 %v186
  %938 = vmatprep.subr.mxu0 0.0
  %939 = vmatpush1.msra.mxu0 %v187
  %940 = vmatprep.subr.mxu0 0.0
  %941 = vmatpush1.msra.mxu0 %v188
  %942 = vmatprep.subr.mxu0 0.0
  %943 = vmatpush1.msra.mxu0 0.0
  %944 = vmatprep.subr.mxu0 0.0
  %945 = vmatpush1.msra.mxu0 0.0
  %946 = vmatprep.subr.mxu0 0.0
  %947 = vmatpush1.msra.mxu0 0.0
  %948 = vmatprep.subr.mxu0 0.0
  %949 = vmatpush1.msra.mxu0 0.0
  %950 = vmatprep.subr.mxu0 0.0
  %951 = vmatpush1.msra.mxu0 0.0
  %952 = vmatprep.subr.mxu0 0.0
  %953 = vmatpush1.msra.mxu0 0.0
  %954 = vmatprep.subr.mxu0 0.0
  %955 = vmatpush1.msra.mxu0 0.0
  %956 = vmatprep.subr.mxu0 0.0
  %957 = vmatpush1.msra.mxu0 0.0
  %958 = vmatprep.subr.mxu0 0.0
  %959 = vmatpush1.msra.mxu0 0.0
  %960 = vmatprep.subr.mxu0 0.0
  %961 = vmatpush1.msra.mxu0 0.0
  %962 = vmatprep.subr.mxu0 0.0
  %963 = vmatpush1.msra.mxu0 0.0
  %964 = vmatprep.subr.mxu0 0.0
  %965 = vmatpush1.msra.mxu0 0.0
  %966 = vmatprep.subr.mxu0 0.0
  %967 = vmatpush1.msra.mxu0 0.0
  %968 = vmatprep.subr.mxu0 0.0
  %969 = vmatpush1.msra.mxu0 0.0
  %970 = vmatprep.subr.mxu0 0.0
  %971 = vmatpush1.msra.mxu0 0.0
  %972 = vmatprep.subr.mxu0 0.0
  %973 = vmatpush1.msra.mxu0 0.0
  %974 = vmatprep.subr.mxu0 0.0
  %975 = vmatpush1.msra.mxu0 0.0
  %976 = vmatprep.subr.mxu0 0.0
  %977 = vmatpush1.msra.mxu0 0.0
  %978 = vmatprep.subr.mxu0 0.0
  %979 = vmatpush1.msra.mxu0 0.0
  %980 = vmatprep.subr.mxu0 0.0
  %981 = vmatpush1.msra.mxu0 0.0
  %982 = vmatprep.subr.mxu0 0.0
  %983 = vmatpush1.msra.mxu0 0.0
  %984 = vmatprep.subr.mxu0 0.0
  %985 = vmatpush1.msra.mxu0 0.0
  %986 = vmatprep.subr.mxu0 0.0
  %987 = vmatpush1.msra.mxu0 0.0
  %988 = vmatprep.subr.mxu0 0.0
  %989 = vmatpush1.msra.mxu0 0.0
  %990 = vmatprep.subr.mxu0 0.0
  %991 = vmatpush1.msra.mxu0 0.0
  %992 = vmatprep.subr.mxu0 0.0
  %993 = vmatpush1.msra.mxu0 0.0
  %994 = vmatprep.subr.mxu0 0.0
  %995 = vmatpush1.msra.mxu0 0.0
  %996 = vmatprep.subr.mxu0 0.0
  %997 = vmatpush1.msra.mxu0 0.0
  %998 = vmatprep.mubr.f32.mxu0 0.0
  %999 = vmatmul.mubr.f32.gmra.mrb[0].mxu0 %v932
  %v1000 = vpop.f32.mrb[0].mxu0
  %v1001 = vadd.f32 0.0, %v1000
  %v1002 = vpop.f32.mrb[0].mxu0
  %1003 = vdwg.mxu0
  %v1004 = vadd.f32 %v931, %v1001
  %v1005 = vxor.u32 %v1004, 2147483648
  %v1006 = vmul.f32 %v1005, 1.442695
  %v1007 = vpow.pop %v1006
  %v1008 = vadd.f32 %v1007, 1.0
  %v1009 = vrcp.pop %v1008
  %v1010 = vmul.f32 1.0, %v1009
  %v1011 = vtanh.pop %v1004
  %v1012 = vmul.f32 %v1010, %v917
  %1014 = vrot.lane.b32.xlu0 %v1011, 64
  %v1015 = vpop.permute.xlu0 %1014
  %v1017 = vmul.f32 %v1010, %v1015
  %1019 = vrot.lane.b32.xlu0 %v1017, 32
  %v1020 = vpop.permute.xlu0 %1019
  %v1022 = vadd.f32 %v1012, %v1020
  %v1023 = vtanh.pop %v1022
  %1025 = vrot.lane.b32.xlu0 %v1023, 64
  %v1026 = vpop.permute.xlu0 %1025
  %v1028 = vmul.f32 %v1010, %v1026
  %1030 = vrot.lane.b32.xlu0 %v1028, 32
  %v1031 = vpop.permute.xlu0 %1030
  %s1033 = scalar_lea.vmem [#allocation5], 56
  %1034 = vst.msk [vmem:[%s1033] sm:$0xff] %vm192, %v1031
  %1035 = vst.msk [vmem:[#allocation2] sm:$0xff] %vm192, %v1031
  %1037 = vrot.lane.b32.xlu0 %v1022, 96
  %v1038 = vpop.permute.xlu0 %1037
  %1040 = vst.msk [vmem:[#allocation3] sm:$0xff] %vm192, %v1038
  %v1041 = vld [vmem:[#allocation5] sm:$0xff]
  %v1042 = vld [vmem:[#allocation5 + $0x8] sm:$0xff]
  %v1043 = vld [vmem:[#allocation5 + $0x10] sm:$0xff]
  %v1044 = vld [vmem:[#allocation5 + $0x18] sm:$0xff]
  %v1045 = vld [vmem:[#allocation5 + $0x20] sm:$0xff]
  %v1046 = vld [vmem:[#allocation5 + $0x28] sm:$0xff]
  %v1047 = vld [vmem:[#allocation5 + $0x30] sm:$0xff]
  %v1048 = vld [vmem:[#allocation5 + $0x38] sm:$0xff]
  %v1049 = vld [vmem:[%s4] sm:$0xff]
  %v1050 = vld [vmem:[%s4 + $0x8] sm:$0xff]
  %v1051 = vld [vmem:[%s4 + $0x10] sm:$0xff]
  %v1052 = vld [vmem:[%s4 + $0x18] sm:$0xff]
  %v1053 = vld [vmem:[%s5] sm:$0x1]
  %v1055 = vlaneseq
  %v1056 = vshrl.u32 %v1055, 7
  %v1057 = vsub.s32 0, %v1056
  %v1058 = vrot.slane %v1053, %v1057
  %v1061 = vsel %vm192, %v1041, 0
  %v1064 = vsel %vm192, %v1042, 0
  %v1067 = vsel %vm192, %v1043, 0
  %v1070 = vsel %vm192, %v1044, 0
  %v1073 = vsel %vm192, %v1045, 0
  %v1076 = vsel %vm192, %v1046, 0
  %v1079 = vsel %vm192, %v1047, 0
  %v1082 = vsel %vm192, %v1048, 0
  %1084 = vmatprep.subr.mxu0 0.0
  %1085 = vmatpush1.msra.mxu0 %v1049
  %1086 = vmatprep.subr.mxu0 0.0
  %1087 = vmatpush1.msra.mxu0 %v1050
  %1088 = vmatprep.subr.mxu0 0.0
  %1089 = vmatpush1.msra.mxu0 %v1051
  %1090 = vmatprep.subr.mxu0 0.0
  %1091 = vmatpush1.msra.mxu0 %v1052
  %1092 = vmatprep.subr.mxu0 0.0
  %1093 = vmatpush1.msra.mxu0 0.0
  %1094 = vmatprep.subr.mxu0 0.0
  %1095 = vmatpush1.msra.mxu0 0.0
  %1096 = vmatprep.subr.mxu0 0.0
  %1097 = vmatpush1.msra.mxu0 0.0
  %1098 = vmatprep.subr.mxu0 0.0
  %1099 = vmatpush1.msra.mxu0 0.0
  %1100 = vmatprep.subr.mxu0 0.0
  %1101 = vmatpush1.msra.mxu0 0.0
  %1102 = vmatprep.subr.mxu0 0.0
  %1103 = vmatpush1.msra.mxu0 0.0
  %1104 = vmatprep.subr.mxu0 0.0
  %1105 = vmatpush1.msra.mxu0 0.0
  %1106 = vmatprep.subr.mxu0 0.0
  %1107 = vmatpush1.msra.mxu0 0.0
  %1108 = vmatprep.subr.mxu0 0.0
  %1109 = vmatpush1.msra.mxu0 0.0
  %1110 = vmatprep.subr.mxu0 0.0
  %1111 = vmatpush1.msra.mxu0 0.0
  %1112 = vmatprep.subr.mxu0 0.0
  %1113 = vmatpush1.msra.mxu0 0.0
  %1114 = vmatprep.subr.mxu0 0.0
  %1115 = vmatpush1.msra.mxu0 0.0
  %1116 = vmatprep.subr.mxu0 0.0
  %1117 = vmatpush1.msra.mxu0 0.0
  %1118 = vmatprep.subr.mxu0 0.0
  %1119 = vmatpush1.msra.mxu0 0.0
  %1120 = vmatprep.subr.mxu0 0.0
  %1121 = vmatpush1.msra.mxu0 0.0
  %1122 = vmatprep.subr.mxu0 0.0
  %1123 = vmatpush1.msra.mxu0 0.0
  %1124 = vmatprep.subr.mxu0 0.0
  %1125 = vmatpush1.msra.mxu0 0.0
  %1126 = vmatprep.subr.mxu0 0.0
  %1127 = vmatpush1.msra.mxu0 0.0
  %1128 = vmatprep.subr.mxu0 0.0
  %1129 = vmatpush1.msra.mxu0 0.0
  %1130 = vmatprep.subr.mxu0 0.0
  %1131 = vmatpush1.msra.mxu0 0.0
  %1132 = vmatprep.subr.mxu0 0.0
  %1133 = vmatpush1.msra.mxu0 0.0
  %1134 = vmatprep.subr.mxu0 0.0
  %1135 = vmatpush1.msra.mxu0 0.0
  %1136 = vmatprep.subr.mxu0 0.0
  %1137 = vmatpush1.msra.mxu0 0.0
  %1138 = vmatprep.subr.mxu0 0.0
  %1139 = vmatpush1.msra.mxu0 0.0
  %1140 = vmatprep.subr.mxu0 0.0
  %1141 = vmatpush1.msra.mxu0 0.0
  %1142 = vmatprep.subr.mxu0 0.0
  %1143 = vmatpush1.msra.mxu0 0.0
  %1144 = vmatprep.subr.mxu0 0.0
  %1145 = vmatpush1.msra.mxu0 0.0
  %1146 = vmatprep.subr.mxu0 0.0
  %1147 = vmatpush1.msra.mxu0 0.0
  %1148 = vmatprep.mubr.f32.mxu0 0.0
  %1149 = vmatmul.mubr.f32.gmra.mrb[0].mxu0 %v1061
  %v1150 = vpop.f32.mrb[0].mxu0
  %v1151 = vadd.f32 %v1058, %v1150
  %v1152 = vpop.f32.mrb[0].mxu0
  %1153 = vmatprep.mubr.f32.mxu0 0.0
  %1154 = vmatmul.mubr.f32.gmra.mrb[0].mxu0 %v1064
  %v1155 = vpop.f32.mrb[0].mxu0
  %v1156 = vadd.f32 %v1058, %v1155
  %v1157 = vpop.f32.mrb[0].mxu0
  %1158 = vmatprep.mubr.f32.mxu0 0.0
  %1159 = vmatmul.mubr.f32.gmra.mrb[0].mxu0 %v1067
  %v1160 = vpop.f32.mrb[0].mxu0
  %v1161 = vadd.f32 %v1058, %v1160
  %v1162 = vpop.f32.mrb[0].mxu0
  %1163 = vmatprep.mubr.f32.mxu0 0.0
  %1164 = vmatmul.mubr.f32.gmra.mrb[0].mxu0 %v1070
  %v1165 = vpop.f32.mrb[0].mxu0
  %v1166 = vadd.f32 %v1058, %v1165
  %v1167 = vpop.f32.mrb[0].mxu0
  %1168 = vmatprep.mubr.f32.mxu0 0.0
  %1169 = vmatmul.mubr.f32.gmra.mrb[0].mxu0 %v1073
  %v1170 = vpop.f32.mrb[0].mxu0
  %v1171 = vadd.f32 %v1058, %v1170
  %v1172 = vpop.f32.mrb[0].mxu0
  %1173 = vmatprep.mubr.f32.mxu0 0.0
  %1174 = vmatmul.mubr.f32.gmra.mrb[0].mxu0 %v1076
  %v1175 = vpop.f32.mrb[0].mxu0
  %v1176 = vadd.f32 %v1058, %v1175
  %v1177 = vpop.f32.mrb[0].mxu0
  %1178 = vmatprep.mubr.f32.mxu0 0.0
  %1179 = vmatmul.mubr.f32.gmra.mrb[0].mxu0 %v1079
  %v1180 = vpop.f32.mrb[0].mxu0
  %v1181 = vadd.f32 %v1058, %v1180
  %v1182 = vpop.f32.mrb[0].mxu0
  %1183 = vmatprep.mubr.f32.mxu0 0.0
  %1184 = vmatmul.mubr.f32.gmra.mrb[0].mxu0 %v1082
  %v1185 = vpop.f32.mrb[0].mxu0
  %v1186 = vadd.f32 %v1058, %v1185
  %v1187 = vpop.f32.mrb[0].mxu0
  %1188 = vdwg.mxu0
  %vm1189 = vcmask 31744
  %v1190 = vsel %vm1189, %v1151, -inf
  %1191 = vmax.xlane.f32.xlu0 %v1190
  %v1192 = vpop.xlane.xlu0 %1191
  %v1193 = vsel %vm1189, %v1156, -inf
  %1194 = vmax.xlane.f32.xlu0 %v1193
  %v1195 = vpop.xlane.xlu0 %1194
  %v1196 = vsel %vm1189, %v1161, -inf
  %1197 = vmax.xlane.f32.xlu0 %v1196
  %v1198 = vpop.xlane.xlu0 %1197
  %v1199 = vsel %vm1189, %v1166, -inf
  %1200 = vmax.xlane.f32.xlu0 %v1199
  %v1201 = vpop.xlane.xlu0 %1200
  %v1202 = vsel %vm1189, %v1171, -inf
  %1203 = vmax.xlane.f32.xlu0 %v1202
  %v1204 = vpop.xlane.xlu0 %1203
  %v1205 = vsel %vm1189, %v1176, -inf
  %1206 = vmax.xlane.f32.xlu0 %v1205
  %v1207 = vpop.xlane.xlu0 %1206
  %v1208 = vsel %vm1189, %v1181, -inf
  %1209 = vmax.xlane.f32.xlu0 %v1208
  %v1210 = vpop.xlane.xlu0 %1209
  %v1211 = vsel %vm1189, %v1186, -inf
  %1212 = vmax.xlane.f32.xlu0 %v1211
  %v1213 = vpop.xlane.xlu0 %1212
  %v1214 = vsub.f32 %v1151, %v1192
  %v1215 = vsub.f32 %v1156, %v1195
  %v1216 = vsub.f32 %v1161, %v1198
  %v1217 = vsub.f32 %v1166, %v1201
  %v1218 = vsub.f32 %v1171, %v1204
  %v1219 = vsub.f32 %v1176, %v1207
  %v1220 = vsub.f32 %v1181, %v1210
  %v1221 = vsub.f32 %v1186, %v1213
  %v1222 = vmul.f32 %v1214, 1.442695
  %v1223 = vpow.pop %v1222
  %v1224 = vmul.f32 %v1215, 1.442695
  %v1225 = vpow.pop %v1224
  %v1226 = vmul.f32 %v1216, 1.442695
  %v1227 = vpow.pop %v1226
  %v1228 = vmul.f32 %v1217, 1.442695
  %v1229 = vpow.pop %v1228
  %v1230 = vmul.f32 %v1218, 1.442695
  %v1231 = vpow.pop %v1230
  %v1232 = vmul.f32 %v1219, 1.442695
  %v1233 = vpow.pop %v1232
  %v1234 = vmul.f32 %v1220, 1.442695
  %v1235 = vpow.pop %v1234
  %v1236 = vmul.f32 %v1221, 1.442695
  %v1237 = vpow.pop %v1236
  %v1238 = vsel %vm1189, %v1223, 0.0
  %1239 = vadd.xlane.f32.xlu0 %v1238
  %v1240 = vpop.xlane.xlu0 %1239
  %v1241 = vsel %vm1189, %v1225, 0.0
  %1242 = vadd.xlane.f32.xlu0 %v1241
  %v1243 = vpop.xlane.xlu0 %1242
  %v1244 = vsel %vm1189, %v1227, 0.0
  %1245 = vadd.xlane.f32.xlu0 %v1244
  %v1246 = vpop.xlane.xlu0 %1245
  %v1247 = vsel %vm1189, %v1229, 0.0
  %1248 = vadd.xlane.f32.xlu0 %v1247
  %v1249 = vpop.xlane.xlu0 %1248
  %v1250 = vsel %vm1189, %v1231, 0.0
  %1251 = vadd.xlane.f32.xlu0 %v1250
  %v1252 = vpop.xlane.xlu0 %1251
  %v1253 = vsel %vm1189, %v1233, 0.0
  %1254 = vadd.xlane.f32.xlu0 %v1253
  %v1255 = vpop.xlane.xlu0 %1254
  %v1256 = vsel %vm1189, %v1235, 0.0
  %1257 = vadd.xlane.f32.xlu0 %v1256
  %v1258 = vpop.xlane.xlu0 %1257
  %v1259 = vsel %vm1189, %v1237, 0.0
  %1260 = vadd.xlane.f32.xlu0 %v1259
  %v1261 = vpop.xlane.xlu0 %1260
  %v1262 = vrcp.pop %v1240
  %v1263 = vrcp.pop %v1243
  %v1264 = vrcp.pop %v1246
  %v1265 = vrcp.pop %v1249
  %v1266 = vrcp.pop %v1252
  %v1267 = vrcp.pop %v1255
  %v1268 = vrcp.pop %v1258
  %v1269 = vrcp.pop %v1261
  %v1270 = vmul.f32 %v1223, %v1262
  %v1271 = vmul.f32 %v1225, %v1263
  %v1272 = vmul.f32 %v1227, %v1264
  %v1273 = vmul.f32 %v1229, %v1265
  %v1274 = vmul.f32 %v1231, %v1266
  %v1275 = vmul.f32 %v1233, %v1267
  %v1276 = vmul.f32 %v1235, %v1268
  %v1277 = vmul.f32 %v1237, %v1269
  %1278 = vst.msk [vmem:[%s6] sm:$0xff] %vm1189, %v1270
  %1279 = vst.msk [vmem:[%s6 + $0x8] sm:$0xff] %vm1189, %v1271
  %1280 = vst.msk [vmem:[%s6 + $0x10] sm:$0xff] %vm1189, %v1272
  %1281 = vst.msk [vmem:[%s6 + $0x18] sm:$0xff] %vm1189, %v1273
  %1282 = vst.msk [vmem:[%s6 + $0x20] sm:$0xff] %vm1189, %v1274
  %1283 = vst.msk [vmem:[%s6 + $0x28] sm:$0xff] %vm1189, %v1275
  %1284 = vst.msk [vmem:[%s6 + $0x30] sm:$0xff] %vm1189, %v1276
  %1285 = vst.msk [vmem:[%s6 + $0x38] sm:$0xff] %vm1189, %v1277
  // Predicated region
  $region30: #{tpu_custom_call.1} parent=0 // pred_check
    _
  $region31: #{tpu_custom_call.1} parent=0 // pred_check_branch
    %1287 = sbr.rel (0) target = $region33
  $region32: #{tpu_custom_call.1} parent=0 // pred_region
    _
  $region33: #{tpu_custom_call.1} parent=0 // pred_fallthru
    _
  // Predicated region
  $region34: #{tpu_custom_call.1} parent=0 // pred_check
    _
  $region35: #{tpu_custom_call.1} parent=0 // pred_check_branch
    %1289 = sbr.rel (0) target = $region37
  $region36: #{tpu_custom_call.1} parent=0 // pred_region
    _
  $region37: #{tpu_custom_call.1} parent=0 // pred_fallthru
    _

</llo_original>
